<compile_context>
chip_gen: v5e
topology: v5e:2x2
jax: 0.10.0
libtpu: 0.0.40
codegen_flags: <defaults>
</compile_context>

<pallas_src>
import jax
import jax.numpy as jnp
from jax.experimental import pallas as pl
from jax.experimental.pallas import tpu as pltpu


def _round_up(n, m):
    return ((n + m - 1) // m) * m


# ----------------------------------------------------------------------------
# Kernel: fused  (x @ W1 + b1).relu()  ->  sigmoid(h @ W2 + b2)
# ----------------------------------------------------------------------------
def fused_mlp_kernel(x_ref, w1_ref, b1_ref, w2_ref, b2_ref, o_ref):
    # layer1: linear + relu (weights already [d_in, hidden_p] — no transpose)
    x = x_ref[...]                                             # [TB, D_in]
    h = jnp.dot(x, w1_ref[...],
                preferred_element_type=jnp.float32)            # [TB, Hp] f32
    h = jnp.maximum(h + b1_ref[...], 0.0)                      # f32 epilogue
    # layer2: linear + sigmoid (weights already [hidden_p, d_out])
    h = h.astype(w2_ref.dtype)                                 # bf16 MXU path if enabled
    y = jnp.dot(h, w2_ref[...],
                preferred_element_type=jnp.float32)            # [TB, D_out] f32
    y = y + b2_ref[...]
    o_ref[...] = jax.nn.sigmoid(y).astype(o_ref.dtype)         # exp on EUP


# ----------------------------------------------------------------------------
# One-time parameter preparation (hoisted out of the per-call hot path).
# ----------------------------------------------------------------------------
def prepare_params(w1, b1, w2, b2, *, compute_dtype=jnp.float32,
                   pad_hidden=True):
    """w1: [hidden, d_in]; b1: [hidden]; w2: [d_out, hidden]; b2: [d_out]
    (PyTorch nn.Linear layout).  Returns kernel-ready params."""
    hidden, _ = w1.shape
    d_out = w2.shape[0]

    w1_t = w1.T.astype(compute_dtype)                  # [d_in, hidden]
    w2_t = w2.T.astype(compute_dtype)                  # [hidden, d_out]
    b1_2d = b1.reshape(1, hidden).astype(jnp.float32)  # f32 epilogue
    b2_2d = b2.reshape(1, d_out).astype(jnp.float32)

    if pad_hidden:
        # Lane-dense intermediate h: zero-pad hidden up to 128. Exact:
        # relu(0*x + 0) = 0 and zero rows of w2_t contribute nothing.
        hidden_p = _round_up(hidden, 128)
        if hidden_p != hidden:
            pad = hidden_p - hidden
            w1_t = jnp.pad(w1_t, ((0, 0), (0, pad)))
            b1_2d = jnp.pad(b1_2d, ((0, 0), (0, pad)))
            w2_t = jnp.pad(w2_t, ((0, pad), (0, 0)))

    return (w1_t, b1_2d, w2_t, b2_2d)


# ----------------------------------------------------------------------------
# Wrapper
# ----------------------------------------------------------------------------
def fused_mlp(x, params, *, tile_b=2048, out_dtype=jnp.float32):
    """x: [B, d_in] (any float dtype); params from prepare_params()."""
    w1_t, b1_2d, w2_t, b2_2d = params
    batch, d_in = x.shape
    _, hidden_p = w1_t.shape
    d_out = w2_t.shape[1]

    # Match compute dtype (bf16 halves x read traffic on v6e/v7x; accumulation
    # stays f32 inside the kernel).
    x = x.astype(w1_t.dtype)

    # Batch tile: biggest tile <= tile_b, multiple of 8, preferring a tile that
    # divides batch exactly so no padding copy of x is needed.
    tile_b = _round_up(max(8, min(tile_b, batch)), 8)
    if batch % tile_b == 0:
        padded_batch = batch
    else:
        padded_batch = _round_up(batch, tile_b)
        # TODO(synk): pad only a small tail slab instead of re-materializing x.
        x = jnp.pad(x, ((0, padded_batch - batch), (0, 0)))
    grid = (padded_batch // tile_b,)

    itemsize_in = jnp.dtype(w1_t.dtype).itemsize
    itemsize_out = jnp.dtype(out_dtype).itemsize
    cost = pl.CostEstimate(
        flops=2 * padded_batch * (d_in * hidden_p + hidden_p * d_out),
        transcendentals=padded_batch * d_out,
        bytes_accessed=(itemsize_in * (padded_batch * d_in
                                       + d_in * hidden_p + hidden_p * d_out)
                        + 4 * (hidden_p + d_out)
                        + itemsize_out * padded_batch * d_out),
    )

    out = pl.pallas_call(
        fused_mlp_kernel,
        out_shape=jax.ShapeDtypeStruct((padded_batch, d_out), out_dtype),
        grid_spec=pltpu.PrefetchScalarGridSpec(
            num_scalar_prefetch=0,
            grid=grid,
            in_specs=[
                # x: tiled over batch, auto double-buffered.
                pl.BlockSpec((tile_b, d_in), lambda i: (i, 0)),
                # weights / biases: full-array blocks, VMEM-resident (~tens KB).
                pl.BlockSpec((d_in, hidden_p), lambda i: (0, 0)),
                pl.BlockSpec((1, hidden_p), lambda i: (0, 0)),
                pl.BlockSpec((hidden_p, d_out), lambda i: (0, 0)),
                pl.BlockSpec((1, d_out), lambda i: (0, 0)),
            ],
            # True-width output block: last dim == full array dim (legal), so
            # no 8x padded writeback and no wasted sigmoid lanes.
            out_specs=pl.BlockSpec((tile_b, d_out), lambda i: (i, 0)),
        ),
        compiler_params=pltpu.CompilerParams(
            # Megacore sharding only pays off with real per-TC work.
            dimension_semantics=(("parallel",) if grid[0] > 1
                                 else ("arbitrary",)),
            vmem_limit_bytes=32 * 1024 * 1024,   # safe on v5e/v6e/v7x
        ),
        cost_estimate=cost,
    )(x, w1_t, b1_2d, w2_t, b2_2d)

    if padded_batch != batch:
        out = out[:batch]
    return out


def reference_mlp(x, w1, b1, w2, b2):
    h = jnp.maximum(x @ w1.T + b1, 0.0)
    return jax.nn.sigmoid(h @ w2.T + b2)


if __name__ == "__main__":
    batch, d_in, hidden, d_out = 512, 32, 64, 16

    key = jax.random.PRNGKey(0)
    kx, kw1, kb1, kw2, kb2 = jax.random.split(key, 5)

    # Deterministic parameter init (uniform, torch-Linear-like scaling).
    lim1 = 1.0 / jnp.sqrt(d_in)
    lim2 = 1.0 / jnp.sqrt(hidden)
    w1 = jax.random.uniform(kw1, (hidden, d_in), jnp.float32, -lim1, lim1)
    b1 = jax.random.uniform(kb1, (hidden,), jnp.float32, -lim1, lim1)
    w2 = jax.random.uniform(kw2, (d_out, hidden), jnp.float32, -lim2, lim2)
    b2 = jax.random.uniform(kb2, (d_out,), jnp.float32, -lim2, lim2)

    x = jax.random.normal(kx, (batch, d_in), jnp.float32)
    ref = reference_mlp(x, w1, b1, w2, b2)

    # ---- f32 path: batch=512 <= tile_b -> grid=(1,), no x-pad copy ----------
    params_f32 = prepare_params(w1, b1, w2, b2)          # one-time setup
    out = fused_mlp(x, params_f32)
    out = jax.block_until_ready(out)
    assert out.shape == (batch, d_out)
    assert jnp.allclose(out, ref, atol=1e-5, rtol=1e-5)

    # ---- bf16-input path (v6e/v7x bandwidth win; f32 accumulation kept) -----
    params_bf16 = prepare_params(w1, b1, w2, b2, compute_dtype=jnp.bfloat16)
    out_bf16 = jax.block_until_ready(fused_mlp(x, params_bf16))
    assert out_bf16.shape == (batch, d_out)
    assert jnp.max(jnp.abs(out_bf16 - ref)) < 5e-2

    print("KERNEL_OK")
</pallas_src>

<mosaic_0001>
module attributes {stable_mosaic.version = 11 : i64} {
  func.func @fused_mlp_kernel(%arg0: i32, %arg1: memref<512x32xf32, #tpu.memory_space<vmem>>, %arg2: memref<32x128xf32, #tpu.memory_space<vmem>>, %arg3: memref<1x128xf32, #tpu.memory_space<vmem>>, %arg4: memref<128x16xf32, #tpu.memory_space<vmem>>, %arg5: memref<1x16xf32, #tpu.memory_space<vmem>>, %arg6: memref<512x16xf32, #tpu.memory_space<vmem>>) attributes {dimension_semantics = [#tpu.dimension_semantics<arbitrary>], iteration_bounds = array<i64: 1>, scalar_prefetch = 0 : i64, scratch_operands = 0 : i64, tpu.core_type = #tpu.core_type<tc>, window_params = [{transform_indices = @transform_0, window_bounds = array<i64: 512, 32>}, {pipeline_mode = #tpu.pipeline_mode<synchronous>, transform_indices = @transform_1, window_bounds = array<i64: 32, 128>}, {pipeline_mode = #tpu.pipeline_mode<synchronous>, transform_indices = @transform_2, window_bounds = array<i64: 1, 128>}, {pipeline_mode = #tpu.pipeline_mode<synchronous>, transform_indices = @transform_3, window_bounds = array<i64: 128, 16>}, {pipeline_mode = #tpu.pipeline_mode<synchronous>, transform_indices = @transform_4, window_bounds = array<i64: 1, 16>}, {transform_indices = @transform_5, window_bounds = array<i64: 512, 16>}]} {
    %c0 = arith.constant 0 : index
    %c0_0 = arith.constant 0 : index
    %0 = vector.load %arg1[%c0, %c0_0] : memref<512x32xf32, #tpu.memory_space<vmem>>, vector<512x32xf32>
    %c0_1 = arith.constant 0 : index
    %c0_2 = arith.constant 0 : index
    %1 = vector.load %arg2[%c0_1, %c0_2] : memref<32x128xf32, #tpu.memory_space<vmem>>, vector<32x128xf32>
    %cst = arith.constant dense<0.000000e+00> : vector<512x128xf32>
    %2 = tpu.matmul %0, %1, %cst {dimension_numbers = #tpu.dot_dimension_numbers<[1], [0], [0], [1], [0, 0, 1, 1], [], []>} : vector<512x32xf32>, vector<32x128xf32>, vector<512x128xf32> -> vector<512x128xf32>
    %c0_3 = arith.constant 0 : index
    %c0_4 = arith.constant 0 : index
    %3 = vector.load %arg3[%c0_3, %c0_4] : memref<1x128xf32, #tpu.memory_space<vmem>>, vector<1x128xf32>
    %4 = vector.broadcast %3 : vector<1x128xf32> to vector<512x128xf32>
    %5 = arith.addf %2, %4 : vector<512x128xf32>
    %cst_5 = arith.constant 0.000000e+00 : f32
    %6 = vector.broadcast %cst_5 : f32 to vector<512x128xf32>
    %7 = arith.maximumf %5, %6 : vector<512x128xf32>
    %c0_6 = arith.constant 0 : index
    %c0_7 = arith.constant 0 : index
    %8 = vector.load %arg4[%c0_6, %c0_7] : memref<128x16xf32, #tpu.memory_space<vmem>>, vector<128x16xf32>
    %cst_8 = arith.constant dense<0.000000e+00> : vector<512x16xf32>
    %9 = tpu.matmul %7, %8, %cst_8 {dimension_numbers = #tpu.dot_dimension_numbers<[1], [0], [0], [1], [0, 0, 1, 1], [], []>} : vector<512x128xf32>, vector<128x16xf32>, vector<512x16xf32> -> vector<512x16xf32>
    %c0_9 = arith.constant 0 : index
    %c0_10 = arith.constant 0 : index
    %10 = vector.load %arg5[%c0_9, %c0_10] : memref<1x16xf32, #tpu.memory_space<vmem>>, vector<1x16xf32>
    %11 = vector.broadcast %10 : vector<1x16xf32> to vector<512x16xf32>
    %12 = arith.addf %9, %11 : vector<512x16xf32>
    %13 = arith.negf %12 : vector<512x16xf32>
    %14 = math.exp %13 : vector<512x16xf32>
    %cst_11 = arith.constant 1.000000e+00 : f32
    %15 = vector.broadcast %cst_11 : f32 to vector<512x16xf32>
    %16 = arith.addf %15, %14 : vector<512x16xf32>
    %17 = arith.divf %15, %16 : vector<512x16xf32>
    %c0_12 = arith.constant 0 : index
    %c0_13 = arith.constant 0 : index
    %18 = vector.load %arg6[%c0_12, %c0_13] : memref<512x16xf32, #tpu.memory_space<vmem>>, vector<512x16xf32>
    tpu.vector_store %arg6[%c0_12, %c0_13], %17 {strides = array<i32>} : memref<512x16xf32, #tpu.memory_space<vmem>>, vector<512x16xf32>,
    return
  }
  func.func @transform_0(%arg0: i32) -> (i32, i32) {
    %c0_i32 = arith.constant 0 : i32
    %c0_i32_0 = arith.constant 0 : i32
    return %arg0, %c0_i32 : i32, i32
  }
  func.func @transform_1(%arg0: i32) -> (i32, i32) {
    %c0_i32 = arith.constant 0 : i32
    %c0_i32_0 = arith.constant 0 : i32
    %c0_i32_1 = arith.constant 0 : i32
    return %c0_i32, %c0_i32_0 : i32, i32
  }
  func.func @transform_2(%arg0: i32) -> (i32, i32) {
    %c0_i32 = arith.constant 0 : i32
    %c0_i32_0 = arith.constant 0 : i32
    %c0_i32_1 = arith.constant 0 : i32
    return %c0_i32, %c0_i32_0 : i32, i32
  }
  func.func @transform_3(%arg0: i32) -> (i32, i32) {
    %c0_i32 = arith.constant 0 : i32
    %c0_i32_0 = arith.constant 0 : i32
    %c0_i32_1 = arith.constant 0 : i32
    return %c0_i32, %c0_i32_0 : i32, i32
  }
  func.func @transform_4(%arg0: i32) -> (i32, i32) {
    %c0_i32 = arith.constant 0 : i32
    %c0_i32_0 = arith.constant 0 : i32
    %c0_i32_1 = arith.constant 0 : i32
    return %c0_i32, %c0_i32_0 : i32, i32
  }
  func.func @transform_5(%arg0: i32) -> (i32, i32) {
    %c0_i32 = arith.constant 0 : i32
    %c0_i32_0 = arith.constant 0 : i32
    return %arg0, %c0_i32 : i32, i32
  }
}

</mosaic_0001>

<llo_original>
// kernel: tpu_custom_call.1
$region0: #{tpu_custom_call.1}
  #allocation0 [shape = 'u32[]', space=smem, size = 0x4, offset = 0x4, fixed_abs, tag = 'smem constant byte address 0x4 - core index']
  #allocation1 [shape = 'u32[72,128]{1,0:T(1,128)}', space=vmem, size = 0x9000, scoped, tag = 'internal scratch']
  %s0 = inlined_call_operand.vmem [shape: f32[512,32], index: 0, kind: input, shape index: {}]
  %s1 = inlined_call_operand.vmem [shape: f32[32,128], index: 1, kind: input, shape index: {}]
  %s2 = inlined_call_operand.vmem [shape: f32[1,128], index: 2, kind: input, shape index: {}]
  %s3 = inlined_call_operand.vmem [shape: f32[128,16], index: 3, kind: input, shape index: {}]
  %s4 = inlined_call_operand.vmem [shape: f32[1,16], index: 4, kind: input, shape index: {}]
  %s5 = inlined_call_operand.vmem [shape: f32[512,16], index: 5, kind: output, shape index: {}]
  %s6 = sld [smem:[#allocation0]]
  $region30: #{tpu_custom_call.1} parent=0
    _
  %s8 = ssub.s32 1, %s6
  %s9 = scalar_select 0, %s8, %s6
  // Predicated region
  $region2: #{tpu_custom_call.1} parent=0 // pred_check
    _
  $region3: #{tpu_custom_call.1} parent=0 // pred_check_branch
    %11 = sbr.rel (0) target = $region5
  $region4: #{tpu_custom_call.1} parent=0 // pred_region
    _
  $region5: #{tpu_custom_call.1} parent=0 // pred_fallthru
    _
  // Predicated region
  $region6: #{tpu_custom_call.1} parent=0 // pred_check
    _
  $region7: #{tpu_custom_call.1} parent=0 // pred_check_branch
    %13 = sbr.rel (0) target = $region9
  $region8: #{tpu_custom_call.1} parent=0 // pred_region
    _
  $region9: #{tpu_custom_call.1} parent=0 // pred_fallthru
    _
  // Predicated region
  $region10: #{tpu_custom_call.1} parent=0 // pred_check
    _
  $region11: #{tpu_custom_call.1} parent=0 // pred_check_branch
    %15 = sbr.rel (0) target = $region13
  $region12: #{tpu_custom_call.1} parent=0 // pred_region
    _
  $region13: #{tpu_custom_call.1} parent=0 // pred_fallthru
    _
  // Predicated region
  $region14: #{tpu_custom_call.1} parent=0 // pred_check
    _
  $region15: #{tpu_custom_call.1} parent=0 // pred_check_branch
    %17 = sbr.rel (0) target = $region17
  $region16: #{tpu_custom_call.1} parent=0 // pred_region
    _
  $region17: #{tpu_custom_call.1} parent=0 // pred_fallthru
    _
  // Predicated region
  $region18: #{tpu_custom_call.1} parent=0 // pred_check
    _
  $region19: #{tpu_custom_call.1} parent=0 // pred_check_branch
    %19 = sbr.rel (0) target = $region21
  $region20: #{tpu_custom_call.1} parent=0 // pred_region
    _
  $region21: #{tpu_custom_call.1} parent=0 // pred_fallthru
    _
  %v20 = vld [vmem:[%s0] sm:$0xff]
  %v21 = vld [vmem:[%s0 + $0x8] sm:$0xff]
  %v22 = vld [vmem:[%s0 + $0x10] sm:$0xff]
  %v23 = vld [vmem:[%s0 + $0x18] sm:$0xff]
  %v24 = vld [vmem:[%s0 + $0x20] sm:$0xff]
  %v25 = vld [vmem:[%s0 + $0x28] sm:$0xff]
  %v26 = vld [vmem:[%s0 + $0x30] sm:$0xff]
  %v27 = vld [vmem:[%s0 + $0x38] sm:$0xff]
  %v28 = vld [vmem:[%s0 + $0x40] sm:$0xff]
  %v29 = vld [vmem:[%s0 + $0x48] sm:$0xff]
  %v30 = vld [vmem:[%s0 + $0x50] sm:$0xff]
  %v31 = vld [vmem:[%s0 + $0x58] sm:$0xff]
  %v32 = vld [vmem:[%s0 + $0x60] sm:$0xff]
  %v33 = vld [vmem:[%s0 + $0x68] sm:$0xff]
  %v34 = vld [vmem:[%s0 + $0x70] sm:$0xff]
  %v35 = vld [vmem:[%s0 + $0x78] sm:$0xff]
  %v36 = vld [vmem:[%s0 + $0x80] sm:$0xff]
  %v37 = vld [vmem:[%s0 + $0x88] sm:$0xff]
  %v38 = vld [vmem:[%s0 + $0x90] sm:$0xff]
  %v39 = vld [vmem:[%s0 + $0x98] sm:$0xff]
  %v40 = vld [vmem:[%s0 + $0xa0] sm:$0xff]
  %v41 = vld [vmem:[%s0 + $0xa8] sm:$0xff]
  %v42 = vld [vmem:[%s0 + $0xb0] sm:$0xff]
  %v43 = vld [vmem:[%s0 + $0xb8] sm:$0xff]
  %v44 = vld [vmem:[%s0 + $0xc0] sm:$0xff]
  %v45 = vld [vmem:[%s0 + $0xc8] sm:$0xff]
  %v46 = vld [vmem:[%s0 + $0xd0] sm:$0xff]
  %v47 = vld [vmem:[%s0 + $0xd8] sm:$0xff]
  %v48 = vld [vmem:[%s0 + $0xe0] sm:$0xff]
  %v49 = vld [vmem:[%s0 + $0xe8] sm:$0xff]
  %v50 = vld [vmem:[%s0 + $0xf0] sm:$0xff]
  %v51 = vld [vmem:[%s0 + $0xf8] sm:$0xff]
  %v52 = vld [vmem:[%s0 + $0x100] sm:$0xff]
  %v53 = vld [vmem:[%s0 + $0x108] sm:$0xff]
  %v54 = vld [vmem:[%s0 + $0x110] sm:$0xff]
  %v55 = vld [vmem:[%s0 + $0x118] sm:$0xff]
  %v56 = vld [vmem:[%s0 + $0x120] sm:$0xff]
  %v57 = vld [vmem:[%s0 + $0x128] sm:$0xff]
  %v58 = vld [vmem:[%s0 + $0x130] sm:$0xff]
  %v59 = vld [vmem:[%s0 + $0x138] sm:$0xff]
  %v60 = vld [vmem:[%s0 + $0x140] sm:$0xff]
  %v61 = vld [vmem:[%s0 + $0x148] sm:$0xff]
  %v62 = vld [vmem:[%s0 + $0x150] sm:$0xff]
  %v63 = vld [vmem:[%s0 + $0x158] sm:$0xff]
  %v64 = vld [vmem:[%s0 + $0x160] sm:$0xff]
  %v65 = vld [vmem:[%s0 + $0x168] sm:$0xff]
  %v66 = vld [vmem:[%s0 + $0x170] sm:$0xff]
  %v67 = vld [vmem:[%s0 + $0x178] sm:$0xff]
  %v68 = vld [vmem:[%s0 + $0x180] sm:$0xff]
  %v69 = vld [vmem:[%s0 + $0x188] sm:$0xff]
  %v70 = vld [vmem:[%s0 + $0x190] sm:$0xff]
  %v71 = vld [vmem:[%s0 + $0x198] sm:$0xff]
  %v72 = vld [vmem:[%s0 + $0x1a0] sm:$0xff]
  %v73 = vld [vmem:[%s0 + $0x1a8] sm:$0xff]
  %v74 = vld [vmem:[%s0 + $0x1b0] sm:$0xff]
  %v75 = vld [vmem:[%s0 + $0x1b8] sm:$0xff]
  %v76 = vld [vmem:[%s0 + $0x1c0] sm:$0xff]
  %v77 = vld [vmem:[%s0 + $0x1c8] sm:$0xff]
  %v78 = vld [vmem:[%s0 + $0x1d0] sm:$0xff]
  %v79 = vld [vmem:[%s0 + $0x1d8] sm:$0xff]
  %v80 = vld [vmem:[%s0 + $0x1e0] sm:$0xff]
  %v81 = vld [vmem:[%s0 + $0x1e8] sm:$0xff]
  %v82 = vld [vmem:[%s0 + $0x1f0] sm:$0xff]
  %v83 = vld [vmem:[%s0 + $0x1f8] sm:$0xff]
  %v84 = vld [vmem:[%s1] sm:$0xff]
  %v85 = vld [vmem:[%s1 + $0x8] sm:$0xff]
  %v86 = vld [vmem:[%s1 + $0x10] sm:$0xff]
  %v87 = vld [vmem:[%s1 + $0x18] sm:$0xff]
  %v88 = vld [vmem:[%s2] sm:$0x1]
  %v90 = vperm.slane %v88, 0
  %vm92 = vcmask 261120
  %v94 = vsel %vm92, %v20, 0
  %v97 = vsel %vm92, %v21, 0
  %v100 = vsel %vm92, %v22, 0
  %v103 = vsel %vm92, %v23, 0
  %v106 = vsel %vm92, %v24, 0
  %v109 = vsel %vm92, %v25, 0
  %v112 = vsel %vm92, %v26, 0
  %v115 = vsel %vm92, %v27, 0
  %v118 = vsel %vm92, %v28, 0
  %v121 = vsel %vm92, %v29, 0
  %v124 = vsel %vm92, %v30, 0
  %v127 = vsel %vm92, %v31, 0
  %v130 = vsel %vm92, %v32, 0
  %v133 = vsel %vm92, %v33, 0
  %v136 = vsel %vm92, %v34, 0
  %v139 = vsel %vm92, %v35, 0
  %v142 = vsel %vm92, %v36, 0
  %v145 = vsel %vm92, %v37, 0
  %v148 = vsel %vm92, %v38, 0
  %v151 = vsel %vm92, %v39, 0
  %v154 = vsel %vm92, %v40, 0
  %v157 = vsel %vm92, %v41, 0
  %v160 = vsel %vm92, %v42, 0
  %v163 = vsel %vm92, %v43, 0
  %v166 = vsel %vm92, %v44, 0
  %v169 = vsel %vm92, %v45, 0
  %v172 = vsel %vm92, %v46, 0
  %v175 = vsel %vm92, %v47, 0
  %v178 = vsel %vm92, %v48, 0
  %v181 = vsel %vm92, %v49, 0
  %v184 = vsel %vm92, %v50, 0
  %v187 = vsel %vm92, %v51, 0
  %v190 = vsel %vm92, %v52, 0
  %v193 = vsel %vm92, %v53, 0
  %v196 = vsel %vm92, %v54, 0
  %v199 = vsel %vm92, %v55, 0
  %v202 = vsel %vm92, %v56, 0
  %v205 = vsel %vm92, %v57, 0
  %v208 = vsel %vm92, %v58, 0
  %v211 = vsel %vm92, %v59, 0
  %v214 = vsel %vm92, %v60, 0
  %v217 = vsel %vm92, %v61, 0
  %v220 = vsel %vm92, %v62, 0
  %v223 = vsel %vm92, %v63, 0
  %v226 = vsel %vm92, %v64, 0
  %v229 = vsel %vm92, %v65, 0
  %v232 = vsel %vm92, %v66, 0
  %v235 = vsel %vm92, %v67, 0
  %v238 = vsel %vm92, %v68, 0
  %v241 = vsel %vm92, %v69, 0
  %v244 = vsel %vm92, %v70, 0
  %v247 = vsel %vm92, %v71, 0
  %v250 = vsel %vm92, %v72, 0
  %v253 = vsel %vm92, %v73, 0
  %v256 = vsel %vm92, %v74, 0
  %v259 = vsel %vm92, %v75, 0
  %v262 = vsel %vm92, %v76, 0
  %v265 = vsel %vm92, %v77, 0
  %v268 = vsel %vm92, %v78, 0
  %v271 = vsel %vm92, %v79, 0
  %v274 = vsel %vm92, %v80, 0
  %v277 = vsel %vm92, %v81, 0
  %v280 = vsel %vm92, %v82, 0
  %v283 = vsel %vm92, %v83, 0
  %285 = vmatpush.msra.mxu0 0.0
  %286 = vmatpush.msra.mxu0 0.0
  %287 = vmatpush.msra.mxu0 0.0
  %288 = vmatpush.msra.mxu0 0.0
  %289 = vmatpush.msra.mxu0 0.0
  %290 = vmatpush.msra.mxu0 0.0
  %291 = vmatpush.msra.mxu0 0.0
  %292 = vmatpush.msra.mxu0 0.0
  %293 = vmatpush.msra.mxu0 0.0
  %294 = vmatpush.msra.mxu0 0.0
  %295 = vmatpush.msra.mxu0 0.0
  %296 = vmatpush.msra.mxu0 0.0
  %297 = vmatpush.msra.mxu0 %v87
  %298 = vmatpush.msra.mxu0 %v86
  %299 = vmatpush.msra.mxu0 %v85
  %300 = vmatpush.msra.mxu0 %v84
  %301 = vmatmul.f32.gmra.mxu0 %v94
  %v302 = vpop.f32.mrf.mxu0
  %v303 = vadd.f32 %v90, %v302
  %304 = vmatmul.f32.gmra.mxu0 %v97
  %v305 = vpop.f32.mrf.mxu0
  %v306 = vadd.f32 %v90, %v305
  %307 = vmatmul.f32.gmra.mxu0 %v100
  %v308 = vpop.f32.mrf.mxu0
  %v309 = vadd.f32 %v90, %v308
  %310 = vmatmul.f32.gmra.mxu0 %v103
  %v311 = vpop.f32.mrf.mxu0
  %v312 = vadd.f32 %v90, %v311
  %313 = vmatmul.f32.gmra.mxu0 %v106
  %v314 = vpop.f32.mrf.mxu0
  %v315 = vadd.f32 %v90, %v314
  %316 = vmatmul.f32.gmra.mxu0 %v109
  %v317 = vpop.f32.mrf.mxu0
  %v318 = vadd.f32 %v90, %v317
  %319 = vmatmul.f32.gmra.mxu0 %v112
  %v320 = vpop.f32.mrf.mxu0
  %v321 = vadd.f32 %v90, %v320
  %322 = vmatmul.f32.gmra.mxu0 %v115
  %v323 = vpop.f32.mrf.mxu0
  %v324 = vadd.f32 %v90, %v323
  %325 = vmatmul.f32.gmra.mxu0 %v118
  %v326 = vpop.f32.mrf.mxu0
  %v327 = vadd.f32 %v90, %v326
  %328 = vmatmul.f32.gmra.mxu0 %v121
  %v329 = vpop.f32.mrf.mxu0
  %v330 = vadd.f32 %v90, %v329
  %331 = vmatmul.f32.gmra.mxu0 %v124
  %v332 = vpop.f32.mrf.mxu0
  %v333 = vadd.f32 %v90, %v332
  %334 = vmatmul.f32.gmra.mxu0 %v127
  %v335 = vpop.f32.mrf.mxu0
  %v336 = vadd.f32 %v90, %v335
  %337 = vmatmul.f32.gmra.mxu0 %v130
  %v338 = vpop.f32.mrf.mxu0
  %v339 = vadd.f32 %v90, %v338
  %340 = vmatmul.f32.gmra.mxu0 %v133
  %v341 = vpop.f32.mrf.mxu0
  %v342 = vadd.f32 %v90, %v341
  %343 = vmatmul.f32.gmra.mxu0 %v136
  %v344 = vpop.f32.mrf.mxu0
  %v345 = vadd.f32 %v90, %v344
  %346 = vmatmul.f32.gmra.mxu0 %v139
  %v347 = vpop.f32.mrf.mxu0
  %v348 = vadd.f32 %v90, %v347
  %349 = vmatmul.f32.gmra.mxu0 %v142
  %v350 = vpop.f32.mrf.mxu0
  %v351 = vadd.f32 %v90, %v350
  %352 = vmatmul.f32.gmra.mxu0 %v145
  %v353 = vpop.f32.mrf.mxu0
  %v354 = vadd.f32 %v90, %v353
  %355 = vmatmul.f32.gmra.mxu0 %v148
  %v356 = vpop.f32.mrf.mxu0
  %v357 = vadd.f32 %v90, %v356
  %358 = vmatmul.f32.gmra.mxu0 %v151
  %v359 = vpop.f32.mrf.mxu0
  %v360 = vadd.f32 %v90, %v359
  %361 = vmatmul.f32.gmra.mxu0 %v154
  %v362 = vpop.f32.mrf.mxu0
  %v363 = vadd.f32 %v90, %v362
  %364 = vmatmul.f32.gmra.mxu0 %v157
  %v365 = vpop.f32.mrf.mxu0
  %v366 = vadd.f32 %v90, %v365
  %367 = vmatmul.f32.gmra.mxu0 %v160
  %v368 = vpop.f32.mrf.mxu0
  %v369 = vadd.f32 %v90, %v368
  %370 = vmatmul.f32.gmra.mxu0 %v163
  %v371 = vpop.f32.mrf.mxu0
  %v372 = vadd.f32 %v90, %v371
  %373 = vmatmul.f32.gmra.mxu0 %v166
  %v374 = vpop.f32.mrf.mxu0
  %v375 = vadd.f32 %v90, %v374
  %376 = vmatmul.f32.gmra.mxu0 %v169
  %v377 = vpop.f32.mrf.mxu0
  %v378 = vadd.f32 %v90, %v377
  %379 = vmatmul.f32.gmra.mxu0 %v172
  %v380 = vpop.f32.mrf.mxu0
  %v381 = vadd.f32 %v90, %v380
  %382 = vmatmul.f32.gmra.mxu0 %v175
  %v383 = vpop.f32.mrf.mxu0
  %v384 = vadd.f32 %v90, %v383
  %385 = vmatmul.f32.gmra.mxu0 %v178
  %v386 = vpop.f32.mrf.mxu0
  %v387 = vadd.f32 %v90, %v386
  %388 = vmatmul.f32.gmra.mxu0 %v181
  %v389 = vpop.f32.mrf.mxu0
  %v390 = vadd.f32 %v90, %v389
  %391 = vmatmul.f32.gmra.mxu0 %v184
  %v392 = vpop.f32.mrf.mxu0
  %v393 = vadd.f32 %v90, %v392
  %394 = vmatmul.f32.gmra.mxu0 %v187
  %v395 = vpop.f32.mrf.mxu0
  %v396 = vadd.f32 %v90, %v395
  %397 = vmatmul.f32.gmra.mxu0 %v190
  %v398 = vpop.f32.mrf.mxu0
  %v399 = vadd.f32 %v90, %v398
  %400 = vmatmul.f32.gmra.mxu0 %v193
  %v401 = vpop.f32.mrf.mxu0
  %v402 = vadd.f32 %v90, %v401
  %403 = vmatmul.f32.gmra.mxu0 %v196
  %v404 = vpop.f32.mrf.mxu0
  %v405 = vadd.f32 %v90, %v404
  %406 = vmatmul.f32.gmra.mxu0 %v199
  %v407 = vpop.f32.mrf.mxu0
  %v408 = vadd.f32 %v90, %v407
  %409 = vmatmul.f32.gmra.mxu0 %v202
  %v410 = vpop.f32.mrf.mxu0
  %v411 = vadd.f32 %v90, %v410
  %412 = vmatmul.f32.gmra.mxu0 %v205
  %v413 = vpop.f32.mrf.mxu0
  %v414 = vadd.f32 %v90, %v413
  %415 = vmatmul.f32.gmra.mxu0 %v208
  %v416 = vpop.f32.mrf.mxu0
  %v417 = vadd.f32 %v90, %v416
  %418 = vmatmul.f32.gmra.mxu0 %v211
  %v419 = vpop.f32.mrf.mxu0
  %v420 = vadd.f32 %v90, %v419
  %421 = vmatmul.f32.gmra.mxu0 %v214
  %v422 = vpop.f32.mrf.mxu0
  %v423 = vadd.f32 %v90, %v422
  %424 = vmatmul.f32.gmra.mxu0 %v217
  %v425 = vpop.f32.mrf.mxu0
  %v426 = vadd.f32 %v90, %v425
  %427 = vmatmul.f32.gmra.mxu0 %v220
  %v428 = vpop.f32.mrf.mxu0
  %v429 = vadd.f32 %v90, %v428
  %430 = vmatmul.f32.gmra.mxu0 %v223
  %v431 = vpop.f32.mrf.mxu0
  %v432 = vadd.f32 %v90, %v431
  %433 = vmatmul.f32.gmra.mxu0 %v226
  %v434 = vpop.f32.mrf.mxu0
  %v435 = vadd.f32 %v90, %v434
  %436 = vmatmul.f32.gmra.mxu0 %v229
  %v437 = vpop.f32.mrf.mxu0
  %v438 = vadd.f32 %v90, %v437
  %439 = vmatmul.f32.gmra.mxu0 %v232
  %v440 = vpop.f32.mrf.mxu0
  %v441 = vadd.f32 %v90, %v440
  %442 = vmatmul.f32.gmra.mxu0 %v235
  %v443 = vpop.f32.mrf.mxu0
  %v444 = vadd.f32 %v90, %v443
  %445 = vmatmul.f32.gmra.mxu0 %v238
  %v446 = vpop.f32.mrf.mxu0
  %v447 = vadd.f32 %v90, %v446
  %448 = vmatmul.f32.gmra.mxu0 %v241
  %v449 = vpop.f32.mrf.mxu0
  %v450 = vadd.f32 %v90, %v449
  %451 = vmatmul.f32.gmra.mxu0 %v244
  %v452 = vpop.f32.mrf.mxu0
  %v453 = vadd.f32 %v90, %v452
  %454 = vmatmul.f32.gmra.mxu0 %v247
  %v455 = vpop.f32.mrf.mxu0
  %v456 = vadd.f32 %v90, %v455
  %457 = vmatmul.f32.gmra.mxu0 %v250
  %v458 = vpop.f32.mrf.mxu0
  %v459 = vadd.f32 %v90, %v458
  %460 = vmatmul.f32.gmra.mxu0 %v253
  %v461 = vpop.f32.mrf.mxu0
  %v462 = vadd.f32 %v90, %v461
  %463 = vmatmul.f32.gmra.mxu0 %v256
  %v464 = vpop.f32.mrf.mxu0
  %v465 = vadd.f32 %v90, %v464
  %466 = vmatmul.f32.gmra.mxu0 %v259
  %v467 = vpop.f32.mrf.mxu0
  %v468 = vadd.f32 %v90, %v467
  %469 = vmatmul.f32.gmra.mxu0 %v262
  %v470 = vpop.f32.mrf.mxu0
  %v471 = vadd.f32 %v90, %v470
  %472 = vmatmul.f32.gmra.mxu0 %v265
  %v473 = vpop.f32.mrf.mxu0
  %v474 = vadd.f32 %v90, %v473
  %475 = vmatmul.f32.gmra.mxu0 %v268
  %v476 = vpop.f32.mrf.mxu0
  %v477 = vadd.f32 %v90, %v476
  %478 = vmatmul.f32.gmra.mxu0 %v271
  %v479 = vpop.f32.mrf.mxu0
  %v480 = vadd.f32 %v90, %v479
  %481 = vmatmul.f32.gmra.mxu0 %v274
  %v482 = vpop.f32.mrf.mxu0
  %v483 = vadd.f32 %v90, %v482
  %484 = vmatmul.f32.gmra.mxu0 %v277
  %v485 = vpop.f32.mrf.mxu0
  %v486 = vadd.f32 %v90, %v485
  %487 = vmatmul.f32.gmra.mxu0 %v280
  %v488 = vpop.f32.mrf.mxu0
  %v489 = vadd.f32 %v90, %v488
  %490 = vmatmul.f32.gmra.mxu0 %v283
  %v491 = vpop.f32.mrf.mxu0
  %v492 = vadd.f32 %v90, %v491
  %493 = vdwg.mxu0
  %v494 = vmax.f32 %v303, 0.0
  %v495 = vmax.f32 %v306, 0.0
  %v496 = vmax.f32 %v309, 0.0
  %v497 = vmax.f32 %v312, 0.0
  %v498 = vmax.f32 %v315, 0.0
  %v499 = vmax.f32 %v318, 0.0
  %v500 = vmax.f32 %v321, 0.0
  %v501 = vmax.f32 %v324, 0.0
  %v502 = vmax.f32 %v327, 0.0
  %v503 = vmax.f32 %v330, 0.0
  %v504 = vmax.f32 %v333, 0.0
  %v505 = vmax.f32 %v336, 0.0
  %v506 = vmax.f32 %v339, 0.0
  %v507 = vmax.f32 %v342, 0.0
  %v508 = vmax.f32 %v345, 0.0
  %v509 = vmax.f32 %v348, 0.0
  %v510 = vmax.f32 %v351, 0.0
  %v511 = vmax.f32 %v354, 0.0
  %v512 = vmax.f32 %v357, 0.0
  %v513 = vmax.f32 %v360, 0.0
  %v514 = vmax.f32 %v363, 0.0
  %v515 = vmax.f32 %v366, 0.0
  %v516 = vmax.f32 %v369, 0.0
  %v517 = vmax.f32 %v372, 0.0
  %v518 = vmax.f32 %v375, 0.0
  %v519 = vmax.f32 %v378, 0.0
  %v520 = vmax.f32 %v381, 0.0
  %v521 = vmax.f32 %v384, 0.0
  %v522 = vmax.f32 %v387, 0.0
  %v523 = vmax.f32 %v390, 0.0
  %v524 = vmax.f32 %v393, 0.0
  %v525 = vmax.f32 %v396, 0.0
  %v526 = vmax.f32 %v399, 0.0
  %v527 = vmax.f32 %v402, 0.0
  %v528 = vmax.f32 %v405, 0.0
  %v529 = vmax.f32 %v408, 0.0
  %v530 = vmax.f32 %v411, 0.0
  %v531 = vmax.f32 %v414, 0.0
  %v532 = vmax.f32 %v417, 0.0
  %v533 = vmax.f32 %v420, 0.0
  %v534 = vmax.f32 %v423, 0.0
  %v535 = vmax.f32 %v426, 0.0
  %v536 = vmax.f32 %v429, 0.0
  %v537 = vmax.f32 %v432, 0.0
  %v538 = vmax.f32 %v435, 0.0
  %v539 = vmax.f32 %v438, 0.0
  %v540 = vmax.f32 %v441, 0.0
  %v541 = vmax.f32 %v444, 0.0
  %v542 = vmax.f32 %v447, 0.0
  %v543 = vmax.f32 %v450, 0.0
  %v544 = vmax.f32 %v453, 0.0
  %v545 = vmax.f32 %v456, 0.0
  %v546 = vmax.f32 %v459, 0.0
  %v547 = vmax.f32 %v462, 0.0
  %v548 = vmax.f32 %v465, 0.0
  %v549 = vmax.f32 %v468, 0.0
  %v550 = vmax.f32 %v471, 0.0
  %v551 = vmax.f32 %v474, 0.0
  %v552 = vmax.f32 %v477, 0.0
  %v553 = vmax.f32 %v480, 0.0
  %v554 = vmax.f32 %v483, 0.0
  %v555 = vmax.f32 %v486, 0.0
  %v556 = vmax.f32 %v489, 0.0
  %v557 = vmax.f32 %v492, 0.0
  %v558 = vld [vmem:[%s3] sm:$0xff]
  %v559 = vld [vmem:[%s3 + $0x8] sm:$0xff]
  %v560 = vld [vmem:[%s3 + $0x10] sm:$0xff]
  %v561 = vld [vmem:[%s3 + $0x18] sm:$0xff]
  %v562 = vld [vmem:[%s3 + $0x20] sm:$0xff]
  %v563 = vld [vmem:[%s3 + $0x28] sm:$0xff]
  %v564 = vld [vmem:[%s3 + $0x30] sm:$0xff]
  %v565 = vld [vmem:[%s3 + $0x38] sm:$0xff]
  %v566 = vld [vmem:[%s3 + $0x40] sm:$0xff]
  %v567 = vld [vmem:[%s3 + $0x48] sm:$0xff]
  %v568 = vld [vmem:[%s3 + $0x50] sm:$0xff]
  %v569 = vld [vmem:[%s3 + $0x58] sm:$0xff]
  %v570 = vld [vmem:[%s3 + $0x60] sm:$0xff]
  %v571 = vld [vmem:[%s3 + $0x68] sm:$0xff]
  %v572 = vld [vmem:[%s3 + $0x70] sm:$0xff]
  %v573 = vld [vmem:[%s3 + $0x78] sm:$0xff]
  %v574 = vld [vmem:[%s4] sm:$0x1]
  %v576 = vperm.slane %v574, 0
  %578 = vmatpush.msra.mxu0 %v573
  %579 = vmatpush.msra.mxu0 %v572
  %580 = vmatpush.msra.mxu0 %v571
  %581 = vmatpush.msra.mxu0 %v570
  %582 = vmatpush.msra.mxu0 %v569
  %583 = vmatpush.msra.mxu0 %v568
  %584 = vmatpush.msra.mxu0 %v567
  %585 = vmatpush.msra.mxu0 %v566
  %586 = vmatpush.msra.mxu0 %v565
  %587 = vmatpush.msra.mxu0 %v564
  %588 = vmatpush.msra.mxu0 %v563
  %589 = vmatpush.msra.mxu0 %v562
  %590 = vmatpush.msra.mxu0 %v561
  %591 = vmatpush.msra.mxu0 %v560
  %592 = vmatpush.msra.mxu0 %v559
  %593 = vmatpush.msra.mxu0 %v558
  %594 = vmatmul.f32.gmra.mxu0 %v494
  %v595 = vpop.f32.mrf.mxu0
  %v596 = vadd.f32 %v576, %v595
  %597 = vmatmul.f32.gmra.mxu0 %v495
  %v598 = vpop.f32.mrf.mxu0
  %v599 = vadd.f32 %v576, %v598
  %600 = vmatmul.f32.gmra.mxu0 %v496
  %v601 = vpop.f32.mrf.mxu0
  %v602 = vadd.f32 %v576, %v601
  %603 = vmatmul.f32.gmra.mxu0 %v497
  %v604 = vpop.f32.mrf.mxu0
  %v605 = vadd.f32 %v576, %v604
  %606 = vmatmul.f32.gmra.mxu0 %v498
  %v607 = vpop.f32.mrf.mxu0
  %v608 = vadd.f32 %v576, %v607
  %609 = vmatmul.f32.gmra.mxu0 %v499
  %v610 = vpop.f32.mrf.mxu0
  %v611 = vadd.f32 %v576, %v610
  %612 = vmatmul.f32.gmra.mxu0 %v500
  %v613 = vpop.f32.mrf.mxu0
  %v614 = vadd.f32 %v576, %v613
  %615 = vmatmul.f32.gmra.mxu0 %v501
  %v616 = vpop.f32.mrf.mxu0
  %v617 = vadd.f32 %v576, %v616
  %618 = vmatmul.f32.gmra.mxu0 %v502
  %v619 = vpop.f32.mrf.mxu0
  %v620 = vadd.f32 %v576, %v619
  %621 = vmatmul.f32.gmra.mxu0 %v503
  %v622 = vpop.f32.mrf.mxu0
  %v623 = vadd.f32 %v576, %v622
  %624 = vmatmul.f32.gmra.mxu0 %v504
  %v625 = vpop.f32.mrf.mxu0
  %v626 = vadd.f32 %v576, %v625
  %627 = vmatmul.f32.gmra.mxu0 %v505
  %v628 = vpop.f32.mrf.mxu0
  %v629 = vadd.f32 %v576, %v628
  %630 = vmatmul.f32.gmra.mxu0 %v506
  %v631 = vpop.f32.mrf.mxu0
  %v632 = vadd.f32 %v576, %v631
  %633 = vmatmul.f32.gmra.mxu0 %v507
  %v634 = vpop.f32.mrf.mxu0
  %v635 = vadd.f32 %v576, %v634
  %636 = vmatmul.f32.gmra.mxu0 %v508
  %v637 = vpop.f32.mrf.mxu0
  %v638 = vadd.f32 %v576, %v637
  %639 = vmatmul.f32.gmra.mxu0 %v509
  %v640 = vpop.f32.mrf.mxu0
  %v641 = vadd.f32 %v576, %v640
  %642 = vmatmul.f32.gmra.mxu0 %v510
  %v643 = vpop.f32.mrf.mxu0
  %v644 = vadd.f32 %v576, %v643
  %645 = vmatmul.f32.gmra.mxu0 %v511
  %v646 = vpop.f32.mrf.mxu0
  %v647 = vadd.f32 %v576, %v646
  %648 = vmatmul.f32.gmra.mxu0 %v512
  %v649 = vpop.f32.mrf.mxu0
  %v650 = vadd.f32 %v576, %v649
  %651 = vmatmul.f32.gmra.mxu0 %v513
  %v652 = vpop.f32.mrf.mxu0
  %v653 = vadd.f32 %v576, %v652
  %654 = vmatmul.f32.gmra.mxu0 %v514
  %v655 = vpop.f32.mrf.mxu0
  %v656 = vadd.f32 %v576, %v655
  %657 = vmatmul.f32.gmra.mxu0 %v515
  %v658 = vpop.f32.mrf.mxu0
  %v659 = vadd.f32 %v576, %v658
  %660 = vmatmul.f32.gmra.mxu0 %v516
  %v661 = vpop.f32.mrf.mxu0
  %v662 = vadd.f32 %v576, %v661
  %663 = vmatmul.f32.gmra.mxu0 %v517
  %v664 = vpop.f32.mrf.mxu0
  %v665 = vadd.f32 %v576, %v664
  %666 = vmatmul.f32.gmra.mxu0 %v518
  %v667 = vpop.f32.mrf.mxu0
  %v668 = vadd.f32 %v576, %v667
  %669 = vmatmul.f32.gmra.mxu0 %v519
  %v670 = vpop.f32.mrf.mxu0
  %v671 = vadd.f32 %v576, %v670
  %672 = vmatmul.f32.gmra.mxu0 %v520
  %v673 = vpop.f32.mrf.mxu0
  %v674 = vadd.f32 %v576, %v673
  %675 = vmatmul.f32.gmra.mxu0 %v521
  %v676 = vpop.f32.mrf.mxu0
  %v677 = vadd.f32 %v576, %v676
  %678 = vmatmul.f32.gmra.mxu0 %v522
  %v679 = vpop.f32.mrf.mxu0
  %v680 = vadd.f32 %v576, %v679
  %681 = vmatmul.f32.gmra.mxu0 %v523
  %v682 = vpop.f32.mrf.mxu0
  %v683 = vadd.f32 %v576, %v682
  %684 = vmatmul.f32.gmra.mxu0 %v524
  %v685 = vpop.f32.mrf.mxu0
  %v686 = vadd.f32 %v576, %v685
  %687 = vmatmul.f32.gmra.mxu0 %v525
  %v688 = vpop.f32.mrf.mxu0
  %v689 = vadd.f32 %v576, %v688
  %690 = vmatmul.f32.gmra.mxu0 %v526
  %v691 = vpop.f32.mrf.mxu0
  %v692 = vadd.f32 %v576, %v691
  %693 = vmatmul.f32.gmra.mxu0 %v527
  %v694 = vpop.f32.mrf.mxu0
  %v695 = vadd.f32 %v576, %v694
  %696 = vmatmul.f32.gmra.mxu0 %v528
  %v697 = vpop.f32.mrf.mxu0
  %v698 = vadd.f32 %v576, %v697
  %699 = vmatmul.f32.gmra.mxu0 %v529
  %v700 = vpop.f32.mrf.mxu0
  %v701 = vadd.f32 %v576, %v700
  %702 = vmatmul.f32.gmra.mxu0 %v530
  %v703 = vpop.f32.mrf.mxu0
  %v704 = vadd.f32 %v576, %v703
  %705 = vmatmul.f32.gmra.mxu0 %v531
  %v706 = vpop.f32.mrf.mxu0
  %v707 = vadd.f32 %v576, %v706
  %708 = vmatmul.f32.gmra.mxu0 %v532
  %v709 = vpop.f32.mrf.mxu0
  %v710 = vadd.f32 %v576, %v709
  %711 = vmatmul.f32.gmra.mxu0 %v533
  %v712 = vpop.f32.mrf.mxu0
  %v713 = vadd.f32 %v576, %v712
  %714 = vmatmul.f32.gmra.mxu0 %v534
  %v715 = vpop.f32.mrf.mxu0
  %v716 = vadd.f32 %v576, %v715
  %717 = vmatmul.f32.gmra.mxu0 %v535
  %v718 = vpop.f32.mrf.mxu0
  %v719 = vadd.f32 %v576, %v718
  %720 = vmatmul.f32.gmra.mxu0 %v536
  %v721 = vpop.f32.mrf.mxu0
  %v722 = vadd.f32 %v576, %v721
  %723 = vmatmul.f32.gmra.mxu0 %v537
  %v724 = vpop.f32.mrf.mxu0
  %v725 = vadd.f32 %v576, %v724
  %726 = vmatmul.f32.gmra.mxu0 %v538
  %v727 = vpop.f32.mrf.mxu0
  %v728 = vadd.f32 %v576, %v727
  %729 = vmatmul.f32.gmra.mxu0 %v539
  %v730 = vpop.f32.mrf.mxu0
  %v731 = vadd.f32 %v576, %v730
  %732 = vmatmul.f32.gmra.mxu0 %v540
  %v733 = vpop.f32.mrf.mxu0
  %v734 = vadd.f32 %v576, %v733
  %735 = vmatmul.f32.gmra.mxu0 %v541
  %v736 = vpop.f32.mrf.mxu0
  %v737 = vadd.f32 %v576, %v736
  %738 = vmatmul.f32.gmra.mxu0 %v542
  %v739 = vpop.f32.mrf.mxu0
  %v740 = vadd.f32 %v576, %v739
  %741 = vmatmul.f32.gmra.mxu0 %v543
  %v742 = vpop.f32.mrf.mxu0
  %v743 = vadd.f32 %v576, %v742
  %744 = vmatmul.f32.gmra.mxu0 %v544
  %v745 = vpop.f32.mrf.mxu0
  %v746 = vadd.f32 %v576, %v745
  %747 = vmatmul.f32.gmra.mxu0 %v545
  %v748 = vpop.f32.mrf.mxu0
  %v749 = vadd.f32 %v576, %v748
  %750 = vmatmul.f32.gmra.mxu0 %v546
  %v751 = vpop.f32.mrf.mxu0
  %v752 = vadd.f32 %v576, %v751
  %753 = vmatmul.f32.gmra.mxu0 %v547
  %v754 = vpop.f32.mrf.mxu0
  %v755 = vadd.f32 %v576, %v754
  %756 = vmatmul.f32.gmra.mxu0 %v548
  %v757 = vpop.f32.mrf.mxu0
  %v758 = vadd.f32 %v576, %v757
  %759 = vmatmul.f32.gmra.mxu0 %v549
  %v760 = vpop.f32.mrf.mxu0
  %v761 = vadd.f32 %v576, %v760
  %762 = vmatmul.f32.gmra.mxu0 %v550
  %v763 = vpop.f32.mrf.mxu0
  %v764 = vadd.f32 %v576, %v763
  %765 = vmatmul.f32.gmra.mxu0 %v551
  %v766 = vpop.f32.mrf.mxu0
  %v767 = vadd.f32 %v576, %v766
  %768 = vmatmul.f32.gmra.mxu0 %v552
  %v769 = vpop.f32.mrf.mxu0
  %v770 = vadd.f32 %v576, %v769
  %771 = vmatmul.f32.gmra.mxu0 %v553
  %v772 = vpop.f32.mrf.mxu0
  %v773 = vadd.f32 %v576, %v772
  %774 = vmatmul.f32.gmra.mxu0 %v554
  %v775 = vpop.f32.mrf.mxu0
  %v776 = vadd.f32 %v576, %v775
  %777 = vmatmul.f32.gmra.mxu0 %v555
  %v778 = vpop.f32.mrf.mxu0
  %v779 = vadd.f32 %v576, %v778
  %780 = vmatmul.f32.gmra.mxu0 %v556
  %v781 = vpop.f32.mrf.mxu0
  %v782 = vadd.f32 %v576, %v781
  %783 = vmatmul.f32.gmra.mxu0 %v557
  %v784 = vpop.f32.mrf.mxu0
  %v785 = vadd.f32 %v576, %v784
  %786 = vdwg.mxu0
  %v787 = vxor.u32 %v596, 2147483648
  %v788 = vxor.u32 %v599, 2147483648
  %v789 = vxor.u32 %v602, 2147483648
  %v790 = vxor.u32 %v605, 2147483648
  %v791 = vxor.u32 %v608, 2147483648
  %v792 = vxor.u32 %v611, 2147483648
  %v793 = vxor.u32 %v614, 2147483648
  %v794 = vxor.u32 %v617, 2147483648
  %v795 = vxor.u32 %v620, 2147483648
  %v796 = vxor.u32 %v623, 2147483648
  %v797 = vxor.u32 %v626, 2147483648
  %v798 = vxor.u32 %v629, 2147483648
  %v799 = vxor.u32 %v632, 2147483648
  %v800 = vxor.u32 %v635, 2147483648
  %v801 = vxor.u32 %v638, 2147483648
  %v802 = vxor.u32 %v641, 2147483648
  %v803 = vxor.u32 %v644, 2147483648
  %v804 = vxor.u32 %v647, 2147483648
  %v805 = vxor.u32 %v650, 2147483648
  %v806 = vxor.u32 %v653, 2147483648
  %v807 = vxor.u32 %v656, 2147483648
  %v808 = vxor.u32 %v659, 2147483648
  %v809 = vxor.u32 %v662, 2147483648
  %v810 = vxor.u32 %v665, 2147483648
  %v811 = vxor.u32 %v668, 2147483648
  %v812 = vxor.u32 %v671, 2147483648
  %v813 = vxor.u32 %v674, 2147483648
  %v814 = vxor.u32 %v677, 2147483648
  %v815 = vxor.u32 %v680, 2147483648
  %v816 = vxor.u32 %v683, 2147483648
  %v817 = vxor.u32 %v686, 2147483648
  %v818 = vxor.u32 %v689, 2147483648
  %v819 = vxor.u32 %v692, 2147483648
  %v820 = vxor.u32 %v695, 2147483648
  %v821 = vxor.u32 %v698, 2147483648
  %v822 = vxor.u32 %v701, 2147483648
  %v823 = vxor.u32 %v704, 2147483648
  %v824 = vxor.u32 %v707, 2147483648
  %v825 = vxor.u32 %v710, 2147483648
  %v826 = vxor.u32 %v713, 2147483648
  %v827 = vxor.u32 %v716, 2147483648
  %v828 = vxor.u32 %v719, 2147483648
  %v829 = vxor.u32 %v722, 2147483648
  %v830 = vxor.u32 %v725, 2147483648
  %v831 = vxor.u32 %v728, 2147483648
  %v832 = vxor.u32 %v731, 2147483648
  %v833 = vxor.u32 %v734, 2147483648
  %v834 = vxor.u32 %v737, 2147483648
  %v835 = vxor.u32 %v740, 2147483648
  %v836 = vxor.u32 %v743, 2147483648
  %v837 = vxor.u32 %v746, 2147483648
  %v838 = vxor.u32 %v749, 2147483648
  %v839 = vxor.u32 %v752, 2147483648
  %v840 = vxor.u32 %v755, 2147483648
  %v841 = vxor.u32 %v758, 2147483648
  %v842 = vxor.u32 %v761, 2147483648
  %v843 = vxor.u32 %v764, 2147483648
  %v844 = vxor.u32 %v767, 2147483648
  %v845 = vxor.u32 %v770, 2147483648
  %v846 = vxor.u32 %v773, 2147483648
  %v847 = vxor.u32 %v776, 2147483648
  %v848 = vxor.u32 %v779, 2147483648
  %v849 = vxor.u32 %v782, 2147483648
  %v850 = vxor.u32 %v785, 2147483648
  %v851 = vmul.f32 %v787, 1.442695
  %v852 = vpow.pop %v851
  %v853 = vmul.f32 %v788, 1.442695
  %v854 = vpow.pop %v853
  %v855 = vmul.f32 %v789, 1.442695
  %v856 = vpow.pop %v855
  %v857 = vmul.f32 %v790, 1.442695
  %v858 = vpow.pop %v857
  %v859 = vmul.f32 %v791, 1.442695
  %v860 = vpow.pop %v859
  %v861 = vmul.f32 %v792, 1.442695
  %v862 = vpow.pop %v861
  %v863 = vmul.f32 %v793, 1.442695
  %v864 = vpow.pop %v863
  %v865 = vmul.f32 %v794, 1.442695
  %v866 = vpow.pop %v865
  %v867 = vmul.f32 %v795, 1.442695
  %v868 = vpow.pop %v867
  %v869 = vmul.f32 %v796, 1.442695
  %v870 = vpow.pop %v869
  %v871 = vmul.f32 %v797, 1.442695
  %v872 = vpow.pop %v871
  %v873 = vmul.f32 %v798, 1.442695
  %v874 = vpow.pop %v873
  %v875 = vmul.f32 %v799, 1.442695
  %v876 = vpow.pop %v875
  %v877 = vmul.f32 %v800, 1.442695
  %v878 = vpow.pop %v877
  %v879 = vmul.f32 %v801, 1.442695
  %v880 = vpow.pop %v879
  %v881 = vmul.f32 %v802, 1.442695
  %v882 = vpow.pop %v881
  %v883 = vmul.f32 %v803, 1.442695
  %v884 = vpow.pop %v883
  %v885 = vmul.f32 %v804, 1.442695
  %v886 = vpow.pop %v885
  %v887 = vmul.f32 %v805, 1.442695
  %v888 = vpow.pop %v887
  %v889 = vmul.f32 %v806, 1.442695
  %v890 = vpow.pop %v889
  %v891 = vmul.f32 %v807, 1.442695
  %v892 = vpow.pop %v891
  %v893 = vmul.f32 %v808, 1.442695
  %v894 = vpow.pop %v893
  %v895 = vmul.f32 %v809, 1.442695
  %v896 = vpow.pop %v895
  %v897 = vmul.f32 %v810, 1.442695
  %v898 = vpow.pop %v897
  %v899 = vmul.f32 %v811, 1.442695
  %v900 = vpow.pop %v899
  %v901 = vmul.f32 %v812, 1.442695
  %v902 = vpow.pop %v901
  %v903 = vmul.f32 %v813, 1.442695
  %v904 = vpow.pop %v903
  %v905 = vmul.f32 %v814, 1.442695
  %v906 = vpow.pop %v905
  %v907 = vmul.f32 %v815, 1.442695
  %v908 = vpow.pop %v907
  %v909 = vmul.f32 %v816, 1.442695
  %v910 = vpow.pop %v909
  %v911 = vmul.f32 %v817, 1.442695
  %v912 = vpow.pop %v911
  %v913 = vmul.f32 %v818, 1.442695
  %v914 = vpow.pop %v913
  %v915 = vmul.f32 %v819, 1.442695
  %v916 = vpow.pop %v915
  %v917 = vmul.f32 %v820, 1.442695
  %v918 = vpow.pop %v917
  %v919 = vmul.f32 %v821, 1.442695
  %v920 = vpow.pop %v919
  %v921 = vmul.f32 %v822, 1.442695
  %v922 = vpow.pop %v921
  %v923 = vmul.f32 %v823, 1.442695
  %v924 = vpow.pop %v923
  %v925 = vmul.f32 %v824, 1.442695
  %v926 = vpow.pop %v925
  %v927 = vmul.f32 %v825, 1.442695
  %v928 = vpow.pop %v927
  %v929 = vmul.f32 %v826, 1.442695
  %v930 = vpow.pop %v929
  %v931 = vmul.f32 %v827, 1.442695
  %v932 = vpow.pop %v931
  %v933 = vmul.f32 %v828, 1.442695
  %v934 = vpow.pop %v933
  %v935 = vmul.f32 %v829, 1.442695
  %v936 = vpow.pop %v935
  %v937 = vmul.f32 %v830, 1.442695
  %v938 = vpow.pop %v937
  %v939 = vmul.f32 %v831, 1.442695
  %v940 = vpow.pop %v939
  %v941 = vmul.f32 %v832, 1.442695
  %v942 = vpow.pop %v941
  %v943 = vmul.f32 %v833, 1.442695
  %v944 = vpow.pop %v943
  %v945 = vmul.f32 %v834, 1.442695
  %v946 = vpow.pop %v945
  %v947 = vmul.f32 %v835, 1.442695
  %v948 = vpow.pop %v947
  %v949 = vmul.f32 %v836, 1.442695
  %v950 = vpow.pop %v949
  %v951 = vmul.f32 %v837, 1.442695
  %v952 = vpow.pop %v951
  %v953 = vmul.f32 %v838, 1.442695
  %v954 = vpow.pop %v953
  %v955 = vmul.f32 %v839, 1.442695
  %v956 = vpow.pop %v955
  %v957 = vmul.f32 %v840, 1.442695
  %v958 = vpow.pop %v957
  %v959 = vmul.f32 %v841, 1.442695
  %v960 = vpow.pop %v959
  %v961 = vmul.f32 %v842, 1.442695
  %v962 = vpow.pop %v961
  %v963 = vmul.f32 %v843, 1.442695
  %v964 = vpow.pop %v963
  %v965 = vmul.f32 %v844, 1.442695
  %v966 = vpow.pop %v965
  %v967 = vmul.f32 %v845, 1.442695
  %v968 = vpow.pop %v967
  %v969 = vmul.f32 %v846, 1.442695
  %v970 = vpow.pop %v969
  %v971 = vmul.f32 %v847, 1.442695
  %v972 = vpow.pop %v971
  %v973 = vmul.f32 %v848, 1.442695
  %v974 = vpow.pop %v973
  %v975 = vmul.f32 %v849, 1.442695
  %v976 = vpow.pop %v975
  %v977 = vmul.f32 %v850, 1.442695
  %v978 = vpow.pop %v977
  %v979 = vadd.f32 %v852, 1.0
  %v980 = vadd.f32 %v854, 1.0
  %v981 = vadd.f32 %v856, 1.0
  %v982 = vadd.f32 %v858, 1.0
  %v983 = vadd.f32 %v860, 1.0
  %v984 = vadd.f32 %v862, 1.0
  %v985 = vadd.f32 %v864, 1.0
  %v986 = vadd.f32 %v866, 1.0
  %v987 = vadd.f32 %v868, 1.0
  %v988 = vadd.f32 %v870, 1.0
  %v989 = vadd.f32 %v872, 1.0
  %v990 = vadd.f32 %v874, 1.0
  %v991 = vadd.f32 %v876, 1.0
  %v992 = vadd.f32 %v878, 1.0
  %v993 = vadd.f32 %v880, 1.0
  %v994 = vadd.f32 %v882, 1.0
  %v995 = vadd.f32 %v884, 1.0
  %v996 = vadd.f32 %v886, 1.0
  %v997 = vadd.f32 %v888, 1.0
  %v998 = vadd.f32 %v890, 1.0
  %v999 = vadd.f32 %v892, 1.0
  %v1000 = vadd.f32 %v894, 1.0
  %v1001 = vadd.f32 %v896, 1.0
  %v1002 = vadd.f32 %v898, 1.0
  %v1003 = vadd.f32 %v900, 1.0
  %v1004 = vadd.f32 %v902, 1.0
  %v1005 = vadd.f32 %v904, 1.0
  %v1006 = vadd.f32 %v906, 1.0
  %v1007 = vadd.f32 %v908, 1.0
  %v1008 = vadd.f32 %v910, 1.0
  %v1009 = vadd.f32 %v912, 1.0
  %v1010 = vadd.f32 %v914, 1.0
  %v1011 = vadd.f32 %v916, 1.0
  %v1012 = vadd.f32 %v918, 1.0
  %v1013 = vadd.f32 %v920, 1.0
  %v1014 = vadd.f32 %v922, 1.0
  %v1015 = vadd.f32 %v924, 1.0
  %v1016 = vadd.f32 %v926, 1.0
  %v1017 = vadd.f32 %v928, 1.0
  %v1018 = vadd.f32 %v930, 1.0
  %v1019 = vadd.f32 %v932, 1.0
  %v1020 = vadd.f32 %v934, 1.0
  %v1021 = vadd.f32 %v936, 1.0
  %v1022 = vadd.f32 %v938, 1.0
  %v1023 = vadd.f32 %v940, 1.0
  %v1024 = vadd.f32 %v942, 1.0
  %v1025 = vadd.f32 %v944, 1.0
  %v1026 = vadd.f32 %v946, 1.0
  %v1027 = vadd.f32 %v948, 1.0
  %v1028 = vadd.f32 %v950, 1.0
  %v1029 = vadd.f32 %v952, 1.0
  %v1030 = vadd.f32 %v954, 1.0
  %v1031 = vadd.f32 %v956, 1.0
  %v1032 = vadd.f32 %v958, 1.0
  %v1033 = vadd.f32 %v960, 1.0
  %v1034 = vadd.f32 %v962, 1.0
  %v1035 = vadd.f32 %v964, 1.0
  %v1036 = vadd.f32 %v966, 1.0
  %v1037 = vadd.f32 %v968, 1.0
  %v1038 = vadd.f32 %v970, 1.0
  %v1039 = vadd.f32 %v972, 1.0
  %v1040 = vadd.f32 %v974, 1.0
  %v1041 = vadd.f32 %v976, 1.0
  %v1042 = vadd.f32 %v978, 1.0
  %v1043 = vrcp.pop %v979
  %v1044 = vmul.f32 %v979, %v1043
  %v1045 = vsub.f32 1.0, %v1044
  %v1046 = vmul.f32 %v1043, %v1045
  %v1047 = vadd.f32 %v1043, %v1046
  %vm1048 = vweird.f32 %v979
  %vm1049 = vweird.f32 %v1043
  %vm1050 = vmor %vm1048, %vm1049
  %v1051 = vsel %vm1050, %v1043, %v1047
  %v1052 = vand.u32 2147483647, %v979
  %vm1053 = vcmp.eq.f32.partialorder %v1052, 8.507059e+37
  %v1054 = vand.u32 %v979, 2147483648
  %v1055 = vor.u32 1.1754944e-38, %v1054
  %v1056 = vsel %vm1053, %v1055, %v1051
  %v1057 = vmul.f32 1.0, %v1056
  %v1058 = vrcp.pop %v980
  %v1059 = vmul.f32 %v980, %v1058
  %v1060 = vsub.f32 1.0, %v1059
  %v1061 = vmul.f32 %v1058, %v1060
  %v1062 = vadd.f32 %v1058, %v1061
  %vm1063 = vweird.f32 %v980
  %vm1064 = vweird.f32 %v1058
  %vm1065 = vmor %vm1063, %vm1064
  %v1066 = vsel %vm1065, %v1058, %v1062
  %v1067 = vand.u32 2147483647, %v980
  %vm1068 = vcmp.eq.f32.partialorder %v1067, 8.507059e+37
  %v1069 = vand.u32 %v980, 2147483648
  %v1070 = vor.u32 1.1754944e-38, %v1069
  %v1071 = vsel %vm1068, %v1070, %v1066
  %v1072 = vmul.f32 1.0, %v1071
  %v1073 = vrcp.pop %v981
  %v1074 = vmul.f32 %v981, %v1073
  %v1075 = vsub.f32 1.0, %v1074
  %v1076 = vmul.f32 %v1073, %v1075
  %v1077 = vadd.f32 %v1073, %v1076
  %vm1078 = vweird.f32 %v981
  %vm1079 = vweird.f32 %v1073
  %vm1080 = vmor %vm1078, %vm1079
  %v1081 = vsel %vm1080, %v1073, %v1077
  %v1082 = vand.u32 2147483647, %v981
  %vm1083 = vcmp.eq.f32.partialorder %v1082, 8.507059e+37
  %v1084 = vand.u32 %v981, 2147483648
  %v1085 = vor.u32 1.1754944e-38, %v1084
  %v1086 = vsel %vm1083, %v1085, %v1081
  %v1087 = vmul.f32 1.0, %v1086
  %v1088 = vrcp.pop %v982
  %v1089 = vmul.f32 %v982, %v1088
  %v1090 = vsub.f32 1.0, %v1089
  %v1091 = vmul.f32 %v1088, %v1090
  %v1092 = vadd.f32 %v1088, %v1091
  %vm1093 = vweird.f32 %v982
  %vm1094 = vweird.f32 %v1088
  %vm1095 = vmor %vm1093, %vm1094
  %v1096 = vsel %vm1095, %v1088, %v1092
  %v1097 = vand.u32 2147483647, %v982
  %vm1098 = vcmp.eq.f32.partialorder %v1097, 8.507059e+37
  %v1099 = vand.u32 %v982, 2147483648
  %v1100 = vor.u32 1.1754944e-38, %v1099
  %v1101 = vsel %vm1098, %v1100, %v1096
  %v1102 = vmul.f32 1.0, %v1101
  %v1103 = vrcp.pop %v983
  %v1104 = vmul.f32 %v983, %v1103
  %v1105 = vsub.f32 1.0, %v1104
  %v1106 = vmul.f32 %v1103, %v1105
  %v1107 = vadd.f32 %v1103, %v1106
  %vm1108 = vweird.f32 %v983
  %vm1109 = vweird.f32 %v1103
  %vm1110 = vmor %vm1108, %vm1109
  %v1111 = vsel %vm1110, %v1103, %v1107
  %v1112 = vand.u32 2147483647, %v983
  %vm1113 = vcmp.eq.f32.partialorder %v1112, 8.507059e+37
  %v1114 = vand.u32 %v983, 2147483648
  %v1115 = vor.u32 1.1754944e-38, %v1114
  %v1116 = vsel %vm1113, %v1115, %v1111
  %v1117 = vmul.f32 1.0, %v1116
  %v1118 = vrcp.pop %v984
  %v1119 = vmul.f32 %v984, %v1118
  %v1120 = vsub.f32 1.0, %v1119
  %v1121 = vmul.f32 %v1118, %v1120
  %v1122 = vadd.f32 %v1118, %v1121
  %vm1123 = vweird.f32 %v984
  %vm1124 = vweird.f32 %v1118
  %vm1125 = vmor %vm1123, %vm1124
  %v1126 = vsel %vm1125, %v1118, %v1122
  %v1127 = vand.u32 2147483647, %v984
  %vm1128 = vcmp.eq.f32.partialorder %v1127, 8.507059e+37
  %v1129 = vand.u32 %v984, 2147483648
  %v1130 = vor.u32 1.1754944e-38, %v1129
  %v1131 = vsel %vm1128, %v1130, %v1126
  %v1132 = vmul.f32 1.0, %v1131
  %v1133 = vrcp.pop %v985
  %v1134 = vmul.f32 %v985, %v1133
  %v1135 = vsub.f32 1.0, %v1134
  %v1136 = vmul.f32 %v1133, %v1135
  %v1137 = vadd.f32 %v1133, %v1136
  %vm1138 = vweird.f32 %v985
  %vm1139 = vweird.f32 %v1133
  %vm1140 = vmor %vm1138, %vm1139
  %v1141 = vsel %vm1140, %v1133, %v1137
  %v1142 = vand.u32 2147483647, %v985
  %vm1143 = vcmp.eq.f32.partialorder %v1142, 8.507059e+37
  %v1144 = vand.u32 %v985, 2147483648
  %v1145 = vor.u32 1.1754944e-38, %v1144
  %v1146 = vsel %vm1143, %v1145, %v1141
  %v1147 = vmul.f32 1.0, %v1146
  %v1148 = vrcp.pop %v986
  %v1149 = vmul.f32 %v986, %v1148
  %v1150 = vsub.f32 1.0, %v1149
  %v1151 = vmul.f32 %v1148, %v1150
  %v1152 = vadd.f32 %v1148, %v1151
  %vm1153 = vweird.f32 %v986
  %vm1154 = vweird.f32 %v1148
  %vm1155 = vmor %vm1153, %vm1154
  %v1156 = vsel %vm1155, %v1148, %v1152
  %v1157 = vand.u32 2147483647, %v986
  %vm1158 = vcmp.eq.f32.partialorder %v1157, 8.507059e+37
  %v1159 = vand.u32 %v986, 2147483648
  %v1160 = vor.u32 1.1754944e-38, %v1159
  %v1161 = vsel %vm1158, %v1160, %v1156
  %v1162 = vmul.f32 1.0, %v1161
  %v1163 = vrcp.pop %v987
  %v1164 = vmul.f32 %v987, %v1163
  %v1165 = vsub.f32 1.0, %v1164
  %v1166 = vmul.f32 %v1163, %v1165
  %v1167 = vadd.f32 %v1163, %v1166
  %vm1168 = vweird.f32 %v987
  %vm1169 = vweird.f32 %v1163
  %vm1170 = vmor %vm1168, %vm1169
  %v1171 = vsel %vm1170, %v1163, %v1167
  %v1172 = vand.u32 2147483647, %v987
  %vm1173 = vcmp.eq.f32.partialorder %v1172, 8.507059e+37
  %v1174 = vand.u32 %v987, 2147483648
  %v1175 = vor.u32 1.1754944e-38, %v1174
  %v1176 = vsel %vm1173, %v1175, %v1171
  %v1177 = vmul.f32 1.0, %v1176
  %v1178 = vrcp.pop %v988
  %v1179 = vmul.f32 %v988, %v1178
  %v1180 = vsub.f32 1.0, %v1179
  %v1181 = vmul.f32 %v1178, %v1180
  %v1182 = vadd.f32 %v1178, %v1181
  %vm1183 = vweird.f32 %v988
  %vm1184 = vweird.f32 %v1178
  %vm1185 = vmor %vm1183, %vm1184
  %v1186 = vsel %vm1185, %v1178, %v1182
  %v1187 = vand.u32 2147483647, %v988
  %vm1188 = vcmp.eq.f32.partialorder %v1187, 8.507059e+37
  %v1189 = vand.u32 %v988, 2147483648
  %v1190 = vor.u32 1.1754944e-38, %v1189
  %v1191 = vsel %vm1188, %v1190, %v1186
  %v1192 = vmul.f32 1.0, %v1191
  %v1193 = vrcp.pop %v989
  %v1194 = vmul.f32 %v989, %v1193
  %v1195 = vsub.f32 1.0, %v1194
  %v1196 = vmul.f32 %v1193, %v1195
  %v1197 = vadd.f32 %v1193, %v1196
  %vm1198 = vweird.f32 %v989
  %vm1199 = vweird.f32 %v1193
  %vm1200 = vmor %vm1198, %vm1199
  %v1201 = vsel %vm1200, %v1193, %v1197
  %v1202 = vand.u32 2147483647, %v989
  %vm1203 = vcmp.eq.f32.partialorder %v1202, 8.507059e+37
  %v1204 = vand.u32 %v989, 2147483648
  %v1205 = vor.u32 1.1754944e-38, %v1204
  %v1206 = vsel %vm1203, %v1205, %v1201
  %v1207 = vmul.f32 1.0, %v1206
  %v1208 = vrcp.pop %v990
  %v1209 = vmul.f32 %v990, %v1208
  %v1210 = vsub.f32 1.0, %v1209
  %v1211 = vmul.f32 %v1208, %v1210
  %v1212 = vadd.f32 %v1208, %v1211
  %vm1213 = vweird.f32 %v990
  %vm1214 = vweird.f32 %v1208
  %vm1215 = vmor %vm1213, %vm1214
  %v1216 = vsel %vm1215, %v1208, %v1212
  %v1217 = vand.u32 2147483647, %v990
  %vm1218 = vcmp.eq.f32.partialorder %v1217, 8.507059e+37
  %v1219 = vand.u32 %v990, 2147483648
  %v1220 = vor.u32 1.1754944e-38, %v1219
  %v1221 = vsel %vm1218, %v1220, %v1216
  %v1222 = vmul.f32 1.0, %v1221
  %v1223 = vrcp.pop %v991
  %v1224 = vmul.f32 %v991, %v1223
  %v1225 = vsub.f32 1.0, %v1224
  %v1226 = vmul.f32 %v1223, %v1225
  %v1227 = vadd.f32 %v1223, %v1226
  %vm1228 = vweird.f32 %v991
  %vm1229 = vweird.f32 %v1223
  %vm1230 = vmor %vm1228, %vm1229
  %v1231 = vsel %vm1230, %v1223, %v1227
  %v1232 = vand.u32 2147483647, %v991
  %vm1233 = vcmp.eq.f32.partialorder %v1232, 8.507059e+37
  %v1234 = vand.u32 %v991, 2147483648
  %v1235 = vor.u32 1.1754944e-38, %v1234
  %v1236 = vsel %vm1233, %v1235, %v1231
  %v1237 = vmul.f32 1.0, %v1236
  %v1238 = vrcp.pop %v992
  %v1239 = vmul.f32 %v992, %v1238
  %v1240 = vsub.f32 1.0, %v1239
  %v1241 = vmul.f32 %v1238, %v1240
  %v1242 = vadd.f32 %v1238, %v1241
  %vm1243 = vweird.f32 %v992
  %vm1244 = vweird.f32 %v1238
  %vm1245 = vmor %vm1243, %vm1244
  %v1246 = vsel %vm1245, %v1238, %v1242
  %v1247 = vand.u32 2147483647, %v992
  %vm1248 = vcmp.eq.f32.partialorder %v1247, 8.507059e+37
  %v1249 = vand.u32 %v992, 2147483648
  %v1250 = vor.u32 1.1754944e-38, %v1249
  %v1251 = vsel %vm1248, %v1250, %v1246
  %v1252 = vmul.f32 1.0, %v1251
  %v1253 = vrcp.pop %v993
  %v1254 = vmul.f32 %v993, %v1253
  %v1255 = vsub.f32 1.0, %v1254
  %v1256 = vmul.f32 %v1253, %v1255
  %v1257 = vadd.f32 %v1253, %v1256
  %vm1258 = vweird.f32 %v993
  %vm1259 = vweird.f32 %v1253
  %vm1260 = vmor %vm1258, %vm1259
  %v1261 = vsel %vm1260, %v1253, %v1257
  %v1262 = vand.u32 2147483647, %v993
  %vm1263 = vcmp.eq.f32.partialorder %v1262, 8.507059e+37
  %v1264 = vand.u32 %v993, 2147483648
  %v1265 = vor.u32 1.1754944e-38, %v1264
  %v1266 = vsel %vm1263, %v1265, %v1261
  %v1267 = vmul.f32 1.0, %v1266
  %v1268 = vrcp.pop %v994
  %v1269 = vmul.f32 %v994, %v1268
  %v1270 = vsub.f32 1.0, %v1269
  %v1271 = vmul.f32 %v1268, %v1270
  %v1272 = vadd.f32 %v1268, %v1271
  %vm1273 = vweird.f32 %v994
  %vm1274 = vweird.f32 %v1268
  %vm1275 = vmor %vm1273, %vm1274
  %v1276 = vsel %vm1275, %v1268, %v1272
  %v1277 = vand.u32 2147483647, %v994
  %vm1278 = vcmp.eq.f32.partialorder %v1277, 8.507059e+37
  %v1279 = vand.u32 %v994, 2147483648
  %v1280 = vor.u32 1.1754944e-38, %v1279
  %v1281 = vsel %vm1278, %v1280, %v1276
  %v1282 = vmul.f32 1.0, %v1281
  %v1283 = vrcp.pop %v995
  %v1284 = vmul.f32 %v995, %v1283
  %v1285 = vsub.f32 1.0, %v1284
  %v1286 = vmul.f32 %v1283, %v1285
  %v1287 = vadd.f32 %v1283, %v1286
  %vm1288 = vweird.f32 %v995
  %vm1289 = vweird.f32 %v1283
  %vm1290 = vmor %vm1288, %vm1289
  %v1291 = vsel %vm1290, %v1283, %v1287
  %v1292 = vand.u32 2147483647, %v995
  %vm1293 = vcmp.eq.f32.partialorder %v1292, 8.507059e+37
  %v1294 = vand.u32 %v995, 2147483648
  %v1295 = vor.u32 1.1754944e-38, %v1294
  %v1296 = vsel %vm1293, %v1295, %v1291
  %v1297 = vmul.f32 1.0, %v1296
  %v1298 = vrcp.pop %v996
  %v1299 = vmul.f32 %v996, %v1298
  %v1300 = vsub.f32 1.0, %v1299
  %v1301 = vmul.f32 %v1298, %v1300
  %v1302 = vadd.f32 %v1298, %v1301
  %vm1303 = vweird.f32 %v996
  %vm1304 = vweird.f32 %v1298
  %vm1305 = vmor %vm1303, %vm1304
  %v1306 = vsel %vm1305, %v1298, %v1302
  %v1307 = vand.u32 2147483647, %v996
  %vm1308 = vcmp.eq.f32.partialorder %v1307, 8.507059e+37
  %v1309 = vand.u32 %v996, 2147483648
  %v1310 = vor.u32 1.1754944e-38, %v1309
  %v1311 = vsel %vm1308, %v1310, %v1306
  %v1312 = vmul.f32 1.0, %v1311
  %v1313 = vrcp.pop %v997
  %v1314 = vmul.f32 %v997, %v1313
  %v1315 = vsub.f32 1.0, %v1314
  %v1316 = vmul.f32 %v1313, %v1315
  %v1317 = vadd.f32 %v1313, %v1316
  %vm1318 = vweird.f32 %v997
  %vm1319 = vweird.f32 %v1313
  %vm1320 = vmor %vm1318, %vm1319
  %v1321 = vsel %vm1320, %v1313, %v1317
  %v1322 = vand.u32 2147483647, %v997
  %vm1323 = vcmp.eq.f32.partialorder %v1322, 8.507059e+37
  %v1324 = vand.u32 %v997, 2147483648
  %v1325 = vor.u32 1.1754944e-38, %v1324
  %v1326 = vsel %vm1323, %v1325, %v1321
  %v1327 = vmul.f32 1.0, %v1326
  %v1328 = vrcp.pop %v998
  %v1329 = vmul.f32 %v998, %v1328
  %v1330 = vsub.f32 1.0, %v1329
  %v1331 = vmul.f32 %v1328, %v1330
  %v1332 = vadd.f32 %v1328, %v1331
  %vm1333 = vweird.f32 %v998
  %vm1334 = vweird.f32 %v1328
  %vm1335 = vmor %vm1333, %vm1334
  %v1336 = vsel %vm1335, %v1328, %v1332
  %v1337 = vand.u32 2147483647, %v998
  %vm1338 = vcmp.eq.f32.partialorder %v1337, 8.507059e+37
  %v1339 = vand.u32 %v998, 2147483648
  %v1340 = vor.u32 1.1754944e-38, %v1339
  %v1341 = vsel %vm1338, %v1340, %v1336
  %v1342 = vmul.f32 1.0, %v1341
  %v1343 = vrcp.pop %v999
  %v1344 = vmul.f32 %v999, %v1343
  %v1345 = vsub.f32 1.0, %v1344
  %v1346 = vmul.f32 %v1343, %v1345
  %v1347 = vadd.f32 %v1343, %v1346
  %vm1348 = vweird.f32 %v999
  %vm1349 = vweird.f32 %v1343
  %vm1350 = vmor %vm1348, %vm1349
  %v1351 = vsel %vm1350, %v1343, %v1347
  %v1352 = vand.u32 2147483647, %v999
  %vm1353 = vcmp.eq.f32.partialorder %v1352, 8.507059e+37
  %v1354 = vand.u32 %v999, 2147483648
  %v1355 = vor.u32 1.1754944e-38, %v1354
  %v1356 = vsel %vm1353, %v1355, %v1351
  %v1357 = vmul.f32 1.0, %v1356
  %v1358 = vrcp.pop %v1000
  %v1359 = vmul.f32 %v1000, %v1358
  %v1360 = vsub.f32 1.0, %v1359
  %v1361 = vmul.f32 %v1358, %v1360
  %v1362 = vadd.f32 %v1358, %v1361
  %vm1363 = vweird.f32 %v1000
  %vm1364 = vweird.f32 %v1358
  %vm1365 = vmor %vm1363, %vm1364
  %v1366 = vsel %vm1365, %v1358, %v1362
  %v1367 = vand.u32 2147483647, %v1000
  %vm1368 = vcmp.eq.f32.partialorder %v1367, 8.507059e+37
  %v1369 = vand.u32 %v1000, 2147483648
  %v1370 = vor.u32 1.1754944e-38, %v1369
  %v1371 = vsel %vm1368, %v1370, %v1366
  %v1372 = vmul.f32 1.0, %v1371
  %v1373 = vrcp.pop %v1001
  %v1374 = vmul.f32 %v1001, %v1373
  %v1375 = vsub.f32 1.0, %v1374
  %v1376 = vmul.f32 %v1373, %v1375
  %v1377 = vadd.f32 %v1373, %v1376
  %vm1378 = vweird.f32 %v1001
  %vm1379 = vweird.f32 %v1373
  %vm1380 = vmor %vm1378, %vm1379
  %v1381 = vsel %vm1380, %v1373, %v1377
  %v1382 = vand.u32 2147483647, %v1001
  %vm1383 = vcmp.eq.f32.partialorder %v1382, 8.507059e+37
  %v1384 = vand.u32 %v1001, 2147483648
  %v1385 = vor.u32 1.1754944e-38, %v1384
  %v1386 = vsel %vm1383, %v1385, %v1381
  %v1387 = vmul.f32 1.0, %v1386
  %v1388 = vrcp.pop %v1002
  %v1389 = vmul.f32 %v1002, %v1388
  %v1390 = vsub.f32 1.0, %v1389
  %v1391 = vmul.f32 %v1388, %v1390
  %v1392 = vadd.f32 %v1388, %v1391
  %vm1393 = vweird.f32 %v1002
  %vm1394 = vweird.f32 %v1388
  %vm1395 = vmor %vm1393, %vm1394
  %v1396 = vsel %vm1395, %v1388, %v1392
  %v1397 = vand.u32 2147483647, %v1002
  %vm1398 = vcmp.eq.f32.partialorder %v1397, 8.507059e+37
  %v1399 = vand.u32 %v1002, 2147483648
  %v1400 = vor.u32 1.1754944e-38, %v1399
  %v1401 = vsel %vm1398, %v1400, %v1396
  %v1402 = vmul.f32 1.0, %v1401
  %v1403 = vrcp.pop %v1003
  %v1404 = vmul.f32 %v1003, %v1403
  %v1405 = vsub.f32 1.0, %v1404
  %v1406 = vmul.f32 %v1403, %v1405
  %v1407 = vadd.f32 %v1403, %v1406
  %vm1408 = vweird.f32 %v1003
  %vm1409 = vweird.f32 %v1403
  %vm1410 = vmor %vm1408, %vm1409
  %v1411 = vsel %vm1410, %v1403, %v1407
  %v1412 = vand.u32 2147483647, %v1003
  %vm1413 = vcmp.eq.f32.partialorder %v1412, 8.507059e+37
  %v1414 = vand.u32 %v1003, 2147483648
  %v1415 = vor.u32 1.1754944e-38, %v1414
  %v1416 = vsel %vm1413, %v1415, %v1411
  %v1417 = vmul.f32 1.0, %v1416
  %v1418 = vrcp.pop %v1004
  %v1419 = vmul.f32 %v1004, %v1418
  %v1420 = vsub.f32 1.0, %v1419
  %v1421 = vmul.f32 %v1418, %v1420
  %v1422 = vadd.f32 %v1418, %v1421
  %vm1423 = vweird.f32 %v1004
  %vm1424 = vweird.f32 %v1418
  %vm1425 = vmor %vm1423, %vm1424
  %v1426 = vsel %vm1425, %v1418, %v1422
  %v1427 = vand.u32 2147483647, %v1004
  %vm1428 = vcmp.eq.f32.partialorder %v1427, 8.507059e+37
  %v1429 = vand.u32 %v1004, 2147483648
  %v1430 = vor.u32 1.1754944e-38, %v1429
  %v1431 = vsel %vm1428, %v1430, %v1426
  %v1432 = vmul.f32 1.0, %v1431
  %v1433 = vrcp.pop %v1005
  %v1434 = vmul.f32 %v1005, %v1433
  %v1435 = vsub.f32 1.0, %v1434
  %v1436 = vmul.f32 %v1433, %v1435
  %v1437 = vadd.f32 %v1433, %v1436
  %vm1438 = vweird.f32 %v1005
  %vm1439 = vweird.f32 %v1433
  %vm1440 = vmor %vm1438, %vm1439
  %v1441 = vsel %vm1440, %v1433, %v1437
  %v1442 = vand.u32 2147483647, %v1005
  %vm1443 = vcmp.eq.f32.partialorder %v1442, 8.507059e+37
  %v1444 = vand.u32 %v1005, 2147483648
  %v1445 = vor.u32 1.1754944e-38, %v1444
  %v1446 = vsel %vm1443, %v1445, %v1441
  %v1447 = vmul.f32 1.0, %v1446
  %v1448 = vrcp.pop %v1006
  %v1449 = vmul.f32 %v1006, %v1448
  %v1450 = vsub.f32 1.0, %v1449
  %v1451 = vmul.f32 %v1448, %v1450
  %v1452 = vadd.f32 %v1448, %v1451
  %vm1453 = vweird.f32 %v1006
  %vm1454 = vweird.f32 %v1448
  %vm1455 = vmor %vm1453, %vm1454
  %v1456 = vsel %vm1455, %v1448, %v1452
  %v1457 = vand.u32 2147483647, %v1006
  %vm1458 = vcmp.eq.f32.partialorder %v1457, 8.507059e+37
  %v1459 = vand.u32 %v1006, 2147483648
  %v1460 = vor.u32 1.1754944e-38, %v1459
  %v1461 = vsel %vm1458, %v1460, %v1456
  %v1462 = vmul.f32 1.0, %v1461
  %v1463 = vrcp.pop %v1007
  %v1464 = vmul.f32 %v1007, %v1463
  %v1465 = vsub.f32 1.0, %v1464
  %v1466 = vmul.f32 %v1463, %v1465
  %v1467 = vadd.f32 %v1463, %v1466
  %vm1468 = vweird.f32 %v1007
  %vm1469 = vweird.f32 %v1463
  %vm1470 = vmor %vm1468, %vm1469
  %v1471 = vsel %vm1470, %v1463, %v1467
  %v1472 = vand.u32 2147483647, %v1007
  %vm1473 = vcmp.eq.f32.partialorder %v1472, 8.507059e+37
  %v1474 = vand.u32 %v1007, 2147483648
  %v1475 = vor.u32 1.1754944e-38, %v1474
  %v1476 = vsel %vm1473, %v1475, %v1471
  %v1477 = vmul.f32 1.0, %v1476
  %v1478 = vrcp.pop %v1008
  %v1479 = vmul.f32 %v1008, %v1478
  %v1480 = vsub.f32 1.0, %v1479
  %v1481 = vmul.f32 %v1478, %v1480
  %v1482 = vadd.f32 %v1478, %v1481
  %vm1483 = vweird.f32 %v1008
  %vm1484 = vweird.f32 %v1478
  %vm1485 = vmor %vm1483, %vm1484
  %v1486 = vsel %vm1485, %v1478, %v1482
  %v1487 = vand.u32 2147483647, %v1008
  %vm1488 = vcmp.eq.f32.partialorder %v1487, 8.507059e+37
  %v1489 = vand.u32 %v1008, 2147483648
  %v1490 = vor.u32 1.1754944e-38, %v1489
  %v1491 = vsel %vm1488, %v1490, %v1486
  %v1492 = vmul.f32 1.0, %v1491
  %v1493 = vrcp.pop %v1009
  %v1494 = vmul.f32 %v1009, %v1493
  %v1495 = vsub.f32 1.0, %v1494
  %v1496 = vmul.f32 %v1493, %v1495
  %v1497 = vadd.f32 %v1493, %v1496
  %vm1498 = vweird.f32 %v1009
  %vm1499 = vweird.f32 %v1493
  %vm1500 = vmor %vm1498, %vm1499
  %v1501 = vsel %vm1500, %v1493, %v1497
  %v1502 = vand.u32 2147483647, %v1009
  %vm1503 = vcmp.eq.f32.partialorder %v1502, 8.507059e+37
  %v1504 = vand.u32 %v1009, 2147483648
  %v1505 = vor.u32 1.1754944e-38, %v1504
  %v1506 = vsel %vm1503, %v1505, %v1501
  %v1507 = vmul.f32 1.0, %v1506
  %v1508 = vrcp.pop %v1010
  %v1509 = vmul.f32 %v1010, %v1508
  %v1510 = vsub.f32 1.0, %v1509
  %v1511 = vmul.f32 %v1508, %v1510
  %v1512 = vadd.f32 %v1508, %v1511
  %vm1513 = vweird.f32 %v1010
  %vm1514 = vweird.f32 %v1508
  %vm1515 = vmor %vm1513, %vm1514
  %v1516 = vsel %vm1515, %v1508, %v1512
  %v1517 = vand.u32 2147483647, %v1010
  %vm1518 = vcmp.eq.f32.partialorder %v1517, 8.507059e+37
  %v1519 = vand.u32 %v1010, 2147483648
  %v1520 = vor.u32 1.1754944e-38, %v1519
  %v1521 = vsel %vm1518, %v1520, %v1516
  %v1522 = vmul.f32 1.0, %v1521
  %v1523 = vrcp.pop %v1011
  %v1524 = vmul.f32 %v1011, %v1523
  %v1525 = vsub.f32 1.0, %v1524
  %v1526 = vmul.f32 %v1523, %v1525
  %v1527 = vadd.f32 %v1523, %v1526
  %vm1528 = vweird.f32 %v1011
  %vm1529 = vweird.f32 %v1523
  %vm1530 = vmor %vm1528, %vm1529
  %v1531 = vsel %vm1530, %v1523, %v1527
  %v1532 = vand.u32 2147483647, %v1011
  %vm1533 = vcmp.eq.f32.partialorder %v1532, 8.507059e+37
  %v1534 = vand.u32 %v1011, 2147483648
  %v1535 = vor.u32 1.1754944e-38, %v1534
  %v1536 = vsel %vm1533, %v1535, %v1531
  %v1537 = vmul.f32 1.0, %v1536
  %v1538 = vrcp.pop %v1012
  %v1539 = vmul.f32 %v1012, %v1538
  %v1540 = vsub.f32 1.0, %v1539
  %v1541 = vmul.f32 %v1538, %v1540
  %v1542 = vadd.f32 %v1538, %v1541
  %vm1543 = vweird.f32 %v1012
  %vm1544 = vweird.f32 %v1538
  %vm1545 = vmor %vm1543, %vm1544
  %v1546 = vsel %vm1545, %v1538, %v1542
  %v1547 = vand.u32 2147483647, %v1012
  %vm1548 = vcmp.eq.f32.partialorder %v1547, 8.507059e+37
  %v1549 = vand.u32 %v1012, 2147483648
  %v1550 = vor.u32 1.1754944e-38, %v1549
  %v1551 = vsel %vm1548, %v1550, %v1546
  %v1552 = vmul.f32 1.0, %v1551
  %v1553 = vrcp.pop %v1013
  %v1554 = vmul.f32 %v1013, %v1553
  %v1555 = vsub.f32 1.0, %v1554
  %v1556 = vmul.f32 %v1553, %v1555
  %v1557 = vadd.f32 %v1553, %v1556
  %vm1558 = vweird.f32 %v1013
  %vm1559 = vweird.f32 %v1553
  %vm1560 = vmor %vm1558, %vm1559
  %v1561 = vsel %vm1560, %v1553, %v1557
  %v1562 = vand.u32 2147483647, %v1013
  %vm1563 = vcmp.eq.f32.partialorder %v1562, 8.507059e+37
  %v1564 = vand.u32 %v1013, 2147483648
  %v1565 = vor.u32 1.1754944e-38, %v1564
  %v1566 = vsel %vm1563, %v1565, %v1561
  %v1567 = vmul.f32 1.0, %v1566
  %v1568 = vrcp.pop %v1014
  %v1569 = vmul.f32 %v1014, %v1568
  %v1570 = vsub.f32 1.0, %v1569
  %v1571 = vmul.f32 %v1568, %v1570
  %v1572 = vadd.f32 %v1568, %v1571
  %vm1573 = vweird.f32 %v1014
  %vm1574 = vweird.f32 %v1568
  %vm1575 = vmor %vm1573, %vm1574
  %v1576 = vsel %vm1575, %v1568, %v1572
  %v1577 = vand.u32 2147483647, %v1014
  %vm1578 = vcmp.eq.f32.partialorder %v1577, 8.507059e+37
  %v1579 = vand.u32 %v1014, 2147483648
  %v1580 = vor.u32 1.1754944e-38, %v1579
  %v1581 = vsel %vm1578, %v1580, %v1576
  %v1582 = vmul.f32 1.0, %v1581
  %v1583 = vrcp.pop %v1015
  %v1584 = vmul.f32 %v1015, %v1583
  %v1585 = vsub.f32 1.0, %v1584
  %v1586 = vmul.f32 %v1583, %v1585
  %v1587 = vadd.f32 %v1583, %v1586
  %vm1588 = vweird.f32 %v1015
  %vm1589 = vweird.f32 %v1583
  %vm1590 = vmor %vm1588, %vm1589
  %v1591 = vsel %vm1590, %v1583, %v1587
  %v1592 = vand.u32 2147483647, %v1015
  %vm1593 = vcmp.eq.f32.partialorder %v1592, 8.507059e+37
  %v1594 = vand.u32 %v1015, 2147483648
  %v1595 = vor.u32 1.1754944e-38, %v1594
  %v1596 = vsel %vm1593, %v1595, %v1591
  %v1597 = vmul.f32 1.0, %v1596
  %v1598 = vrcp.pop %v1016
  %v1599 = vmul.f32 %v1016, %v1598
  %v1600 = vsub.f32 1.0, %v1599
  %v1601 = vmul.f32 %v1598, %v1600
  %v1602 = vadd.f32 %v1598, %v1601
  %vm1603 = vweird.f32 %v1016
  %vm1604 = vweird.f32 %v1598
  %vm1605 = vmor %vm1603, %vm1604
  %v1606 = vsel %vm1605, %v1598, %v1602
  %v1607 = vand.u32 2147483647, %v1016
  %vm1608 = vcmp.eq.f32.partialorder %v1607, 8.507059e+37
  %v1609 = vand.u32 %v1016, 2147483648
  %v1610 = vor.u32 1.1754944e-38, %v1609
  %v1611 = vsel %vm1608, %v1610, %v1606
  %v1612 = vmul.f32 1.0, %v1611
  %v1613 = vrcp.pop %v1017
  %v1614 = vmul.f32 %v1017, %v1613
  %v1615 = vsub.f32 1.0, %v1614
  %v1616 = vmul.f32 %v1613, %v1615
  %v1617 = vadd.f32 %v1613, %v1616
  %vm1618 = vweird.f32 %v1017
  %vm1619 = vweird.f32 %v1613
  %vm1620 = vmor %vm1618, %vm1619
  %v1621 = vsel %vm1620, %v1613, %v1617
  %v1622 = vand.u32 2147483647, %v1017
  %vm1623 = vcmp.eq.f32.partialorder %v1622, 8.507059e+37
  %v1624 = vand.u32 %v1017, 2147483648
  %v1625 = vor.u32 1.1754944e-38, %v1624
  %v1626 = vsel %vm1623, %v1625, %v1621
  %v1627 = vmul.f32 1.0, %v1626
  %v1628 = vrcp.pop %v1018
  %v1629 = vmul.f32 %v1018, %v1628
  %v1630 = vsub.f32 1.0, %v1629
  %v1631 = vmul.f32 %v1628, %v1630
  %v1632 = vadd.f32 %v1628, %v1631
  %vm1633 = vweird.f32 %v1018
  %vm1634 = vweird.f32 %v1628
  %vm1635 = vmor %vm1633, %vm1634
  %v1636 = vsel %vm1635, %v1628, %v1632
  %v1637 = vand.u32 2147483647, %v1018
  %vm1638 = vcmp.eq.f32.partialorder %v1637, 8.507059e+37
  %v1639 = vand.u32 %v1018, 2147483648
  %v1640 = vor.u32 1.1754944e-38, %v1639
  %v1641 = vsel %vm1638, %v1640, %v1636
  %v1642 = vmul.f32 1.0, %v1641
  %v1643 = vrcp.pop %v1019
  %v1644 = vmul.f32 %v1019, %v1643
  %v1645 = vsub.f32 1.0, %v1644
  %v1646 = vmul.f32 %v1643, %v1645
  %v1647 = vadd.f32 %v1643, %v1646
  %vm1648 = vweird.f32 %v1019
  %vm1649 = vweird.f32 %v1643
  %vm1650 = vmor %vm1648, %vm1649
  %v1651 = vsel %vm1650, %v1643, %v1647
  %v1652 = vand.u32 2147483647, %v1019
  %vm1653 = vcmp.eq.f32.partialorder %v1652, 8.507059e+37
  %v1654 = vand.u32 %v1019, 2147483648
  %v1655 = vor.u32 1.1754944e-38, %v1654
  %v1656 = vsel %vm1653, %v1655, %v1651
  %v1657 = vmul.f32 1.0, %v1656
  %v1658 = vrcp.pop %v1020
  %v1659 = vmul.f32 %v1020, %v1658
  %v1660 = vsub.f32 1.0, %v1659
  %v1661 = vmul.f32 %v1658, %v1660
  %v1662 = vadd.f32 %v1658, %v1661
  %vm1663 = vweird.f32 %v1020
  %vm1664 = vweird.f32 %v1658
  %vm1665 = vmor %vm1663, %vm1664
  %v1666 = vsel %vm1665, %v1658, %v1662
  %v1667 = vand.u32 2147483647, %v1020
  %vm1668 = vcmp.eq.f32.partialorder %v1667, 8.507059e+37
  %v1669 = vand.u32 %v1020, 2147483648
  %v1670 = vor.u32 1.1754944e-38, %v1669
  %v1671 = vsel %vm1668, %v1670, %v1666
  %v1672 = vmul.f32 1.0, %v1671
  %v1673 = vrcp.pop %v1021
  %v1674 = vmul.f32 %v1021, %v1673
  %v1675 = vsub.f32 1.0, %v1674
  %v1676 = vmul.f32 %v1673, %v1675
  %v1677 = vadd.f32 %v1673, %v1676
  %vm1678 = vweird.f32 %v1021
  %vm1679 = vweird.f32 %v1673
  %vm1680 = vmor %vm1678, %vm1679
  %v1681 = vsel %vm1680, %v1673, %v1677
  %v1682 = vand.u32 2147483647, %v1021
  %vm1683 = vcmp.eq.f32.partialorder %v1682, 8.507059e+37
  %v1684 = vand.u32 %v1021, 2147483648
  %v1685 = vor.u32 1.1754944e-38, %v1684
  %v1686 = vsel %vm1683, %v1685, %v1681
  %v1687 = vmul.f32 1.0, %v1686
  %v1688 = vrcp.pop %v1022
  %v1689 = vmul.f32 %v1022, %v1688
  %v1690 = vsub.f32 1.0, %v1689
  %v1691 = vmul.f32 %v1688, %v1690
  %v1692 = vadd.f32 %v1688, %v1691
  %vm1693 = vweird.f32 %v1022
  %vm1694 = vweird.f32 %v1688
  %vm1695 = vmor %vm1693, %vm1694
  %v1696 = vsel %vm1695, %v1688, %v1692
  %v1697 = vand.u32 2147483647, %v1022
  %vm1698 = vcmp.eq.f32.partialorder %v1697, 8.507059e+37
  %v1699 = vand.u32 %v1022, 2147483648
  %v1700 = vor.u32 1.1754944e-38, %v1699
  %v1701 = vsel %vm1698, %v1700, %v1696
  %v1702 = vmul.f32 1.0, %v1701
  %v1703 = vrcp.pop %v1023
  %v1704 = vmul.f32 %v1023, %v1703
  %v1705 = vsub.f32 1.0, %v1704
  %v1706 = vmul.f32 %v1703, %v1705
  %v1707 = vadd.f32 %v1703, %v1706
  %vm1708 = vweird.f32 %v1023
  %vm1709 = vweird.f32 %v1703
  %vm1710 = vmor %vm1708, %vm1709
  %v1711 = vsel %vm1710, %v1703, %v1707
  %v1712 = vand.u32 2147483647, %v1023
  %vm1713 = vcmp.eq.f32.partialorder %v1712, 8.507059e+37
  %v1714 = vand.u32 %v1023, 2147483648
  %v1715 = vor.u32 1.1754944e-38, %v1714
  %v1716 = vsel %vm1713, %v1715, %v1711
  %v1717 = vmul.f32 1.0, %v1716
  %v1718 = vrcp.pop %v1024
  %v1719 = vmul.f32 %v1024, %v1718
  %v1720 = vsub.f32 1.0, %v1719
  %v1721 = vmul.f32 %v1718, %v1720
  %v1722 = vadd.f32 %v1718, %v1721
  %vm1723 = vweird.f32 %v1024
  %vm1724 = vweird.f32 %v1718
  %vm1725 = vmor %vm1723, %vm1724
  %v1726 = vsel %vm1725, %v1718, %v1722
  %v1727 = vand.u32 2147483647, %v1024
  %vm1728 = vcmp.eq.f32.partialorder %v1727, 8.507059e+37
  %v1729 = vand.u32 %v1024, 2147483648
  %v1730 = vor.u32 1.1754944e-38, %v1729
  %v1731 = vsel %vm1728, %v1730, %v1726
  %v1732 = vmul.f32 1.0, %v1731
  %v1733 = vrcp.pop %v1025
  %v1734 = vmul.f32 %v1025, %v1733
  %v1735 = vsub.f32 1.0, %v1734
  %v1736 = vmul.f32 %v1733, %v1735
  %v1737 = vadd.f32 %v1733, %v1736
  %vm1738 = vweird.f32 %v1025
  %vm1739 = vweird.f32 %v1733
  %vm1740 = vmor %vm1738, %vm1739
  %v1741 = vsel %vm1740, %v1733, %v1737
  %v1742 = vand.u32 2147483647, %v1025
  %vm1743 = vcmp.eq.f32.partialorder %v1742, 8.507059e+37
  %v1744 = vand.u32 %v1025, 2147483648
  %v1745 = vor.u32 1.1754944e-38, %v1744
  %v1746 = vsel %vm1743, %v1745, %v1741
  %v1747 = vmul.f32 1.0, %v1746
  %v1748 = vrcp.pop %v1026
  %v1749 = vmul.f32 %v1026, %v1748
  %v1750 = vsub.f32 1.0, %v1749
  %v1751 = vmul.f32 %v1748, %v1750
  %v1752 = vadd.f32 %v1748, %v1751
  %vm1753 = vweird.f32 %v1026
  %vm1754 = vweird.f32 %v1748
  %vm1755 = vmor %vm1753, %vm1754
  %v1756 = vsel %vm1755, %v1748, %v1752
  %v1757 = vand.u32 2147483647, %v1026
  %vm1758 = vcmp.eq.f32.partialorder %v1757, 8.507059e+37
  %v1759 = vand.u32 %v1026, 2147483648
  %v1760 = vor.u32 1.1754944e-38, %v1759
  %v1761 = vsel %vm1758, %v1760, %v1756
  %v1762 = vmul.f32 1.0, %v1761
  %v1763 = vrcp.pop %v1027
  %v1764 = vmul.f32 %v1027, %v1763
  %v1765 = vsub.f32 1.0, %v1764
  %v1766 = vmul.f32 %v1763, %v1765
  %v1767 = vadd.f32 %v1763, %v1766
  %vm1768 = vweird.f32 %v1027
  %vm1769 = vweird.f32 %v1763
  %vm1770 = vmor %vm1768, %vm1769
  %v1771 = vsel %vm1770, %v1763, %v1767
  %v1772 = vand.u32 2147483647, %v1027
  %vm1773 = vcmp.eq.f32.partialorder %v1772, 8.507059e+37
  %v1774 = vand.u32 %v1027, 2147483648
  %v1775 = vor.u32 1.1754944e-38, %v1774
  %v1776 = vsel %vm1773, %v1775, %v1771
  %v1777 = vmul.f32 1.0, %v1776
  %v1778 = vrcp.pop %v1028
  %v1779 = vmul.f32 %v1028, %v1778
  %v1780 = vsub.f32 1.0, %v1779
  %v1781 = vmul.f32 %v1778, %v1780
  %v1782 = vadd.f32 %v1778, %v1781
  %vm1783 = vweird.f32 %v1028
  %vm1784 = vweird.f32 %v1778
  %vm1785 = vmor %vm1783, %vm1784
  %v1786 = vsel %vm1785, %v1778, %v1782
  %v1787 = vand.u32 2147483647, %v1028
  %vm1788 = vcmp.eq.f32.partialorder %v1787, 8.507059e+37
  %v1789 = vand.u32 %v1028, 2147483648
  %v1790 = vor.u32 1.1754944e-38, %v1789
  %v1791 = vsel %vm1788, %v1790, %v1786
  %v1792 = vmul.f32 1.0, %v1791
  %v1793 = vrcp.pop %v1029
  %v1794 = vmul.f32 %v1029, %v1793
  %v1795 = vsub.f32 1.0, %v1794
  %v1796 = vmul.f32 %v1793, %v1795
  %v1797 = vadd.f32 %v1793, %v1796
  %vm1798 = vweird.f32 %v1029
  %vm1799 = vweird.f32 %v1793
  %vm1800 = vmor %vm1798, %vm1799
  %v1801 = vsel %vm1800, %v1793, %v1797
  %v1802 = vand.u32 2147483647, %v1029
  %vm1803 = vcmp.eq.f32.partialorder %v1802, 8.507059e+37
  %v1804 = vand.u32 %v1029, 2147483648
  %v1805 = vor.u32 1.1754944e-38, %v1804
  %v1806 = vsel %vm1803, %v1805, %v1801
  %v1807 = vmul.f32 1.0, %v1806
  %v1808 = vrcp.pop %v1030
  %v1809 = vmul.f32 %v1030, %v1808
  %v1810 = vsub.f32 1.0, %v1809
  %v1811 = vmul.f32 %v1808, %v1810
  %v1812 = vadd.f32 %v1808, %v1811
  %vm1813 = vweird.f32 %v1030
  %vm1814 = vweird.f32 %v1808
  %vm1815 = vmor %vm1813, %vm1814
  %v1816 = vsel %vm1815, %v1808, %v1812
  %v1817 = vand.u32 2147483647, %v1030
  %vm1818 = vcmp.eq.f32.partialorder %v1817, 8.507059e+37
  %v1819 = vand.u32 %v1030, 2147483648
  %v1820 = vor.u32 1.1754944e-38, %v1819
  %v1821 = vsel %vm1818, %v1820, %v1816
  %v1822 = vmul.f32 1.0, %v1821
  %v1823 = vrcp.pop %v1031
  %v1824 = vmul.f32 %v1031, %v1823
  %v1825 = vsub.f32 1.0, %v1824
  %v1826 = vmul.f32 %v1823, %v1825
  %v1827 = vadd.f32 %v1823, %v1826
  %vm1828 = vweird.f32 %v1031
  %vm1829 = vweird.f32 %v1823
  %vm1830 = vmor %vm1828, %vm1829
  %v1831 = vsel %vm1830, %v1823, %v1827
  %v1832 = vand.u32 2147483647, %v1031
  %vm1833 = vcmp.eq.f32.partialorder %v1832, 8.507059e+37
  %v1834 = vand.u32 %v1031, 2147483648
  %v1835 = vor.u32 1.1754944e-38, %v1834
  %v1836 = vsel %vm1833, %v1835, %v1831
  %v1837 = vmul.f32 1.0, %v1836
  %v1838 = vrcp.pop %v1032
  %v1839 = vmul.f32 %v1032, %v1838
  %v1840 = vsub.f32 1.0, %v1839
  %v1841 = vmul.f32 %v1838, %v1840
  %v1842 = vadd.f32 %v1838, %v1841
  %vm1843 = vweird.f32 %v1032
  %vm1844 = vweird.f32 %v1838
  %vm1845 = vmor %vm1843, %vm1844
  %v1846 = vsel %vm1845, %v1838, %v1842
  %v1847 = vand.u32 2147483647, %v1032
  %vm1848 = vcmp.eq.f32.partialorder %v1847, 8.507059e+37
  %v1849 = vand.u32 %v1032, 2147483648
  %v1850 = vor.u32 1.1754944e-38, %v1849
  %v1851 = vsel %vm1848, %v1850, %v1846
  %v1852 = vmul.f32 1.0, %v1851
  %v1853 = vrcp.pop %v1033
  %v1854 = vmul.f32 %v1033, %v1853
  %v1855 = vsub.f32 1.0, %v1854
  %v1856 = vmul.f32 %v1853, %v1855
  %v1857 = vadd.f32 %v1853, %v1856
  %vm1858 = vweird.f32 %v1033
  %vm1859 = vweird.f32 %v1853
  %vm1860 = vmor %vm1858, %vm1859
  %v1861 = vsel %vm1860, %v1853, %v1857
  %v1862 = vand.u32 2147483647, %v1033
  %vm1863 = vcmp.eq.f32.partialorder %v1862, 8.507059e+37
  %v1864 = vand.u32 %v1033, 2147483648
  %v1865 = vor.u32 1.1754944e-38, %v1864
  %v1866 = vsel %vm1863, %v1865, %v1861
  %v1867 = vmul.f32 1.0, %v1866
  %v1868 = vrcp.pop %v1034
  %v1869 = vmul.f32 %v1034, %v1868
  %v1870 = vsub.f32 1.0, %v1869
  %v1871 = vmul.f32 %v1868, %v1870
  %v1872 = vadd.f32 %v1868, %v1871
  %vm1873 = vweird.f32 %v1034
  %vm1874 = vweird.f32 %v1868
  %vm1875 = vmor %vm1873, %vm1874
  %v1876 = vsel %vm1875, %v1868, %v1872
  %v1877 = vand.u32 2147483647, %v1034
  %vm1878 = vcmp.eq.f32.partialorder %v1877, 8.507059e+37
  %v1879 = vand.u32 %v1034, 2147483648
  %v1880 = vor.u32 1.1754944e-38, %v1879
  %v1881 = vsel %vm1878, %v1880, %v1876
  %v1882 = vmul.f32 1.0, %v1881
  %v1883 = vrcp.pop %v1035
  %v1884 = vmul.f32 %v1035, %v1883
  %v1885 = vsub.f32 1.0, %v1884
  %v1886 = vmul.f32 %v1883, %v1885
  %v1887 = vadd.f32 %v1883, %v1886
  %vm1888 = vweird.f32 %v1035
  %vm1889 = vweird.f32 %v1883
  %vm1890 = vmor %vm1888, %vm1889
  %v1891 = vsel %vm1890, %v1883, %v1887
  %v1892 = vand.u32 2147483647, %v1035
  %vm1893 = vcmp.eq.f32.partialorder %v1892, 8.507059e+37
  %v1894 = vand.u32 %v1035, 2147483648
  %v1895 = vor.u32 1.1754944e-38, %v1894
  %v1896 = vsel %vm1893, %v1895, %v1891
  %v1897 = vmul.f32 1.0, %v1896
  %v1898 = vrcp.pop %v1036
  %v1899 = vmul.f32 %v1036, %v1898
  %v1900 = vsub.f32 1.0, %v1899
  %v1901 = vmul.f32 %v1898, %v1900
  %v1902 = vadd.f32 %v1898, %v1901
  %vm1903 = vweird.f32 %v1036
  %vm1904 = vweird.f32 %v1898
  %vm1905 = vmor %vm1903, %vm1904
  %v1906 = vsel %vm1905, %v1898, %v1902
  %v1907 = vand.u32 2147483647, %v1036
  %vm1908 = vcmp.eq.f32.partialorder %v1907, 8.507059e+37
  %v1909 = vand.u32 %v1036, 2147483648
  %v1910 = vor.u32 1.1754944e-38, %v1909
  %v1911 = vsel %vm1908, %v1910, %v1906
  %v1912 = vmul.f32 1.0, %v1911
  %v1913 = vrcp.pop %v1037
  %v1914 = vmul.f32 %v1037, %v1913
  %v1915 = vsub.f32 1.0, %v1914
  %v1916 = vmul.f32 %v1913, %v1915
  %v1917 = vadd.f32 %v1913, %v1916
  %vm1918 = vweird.f32 %v1037
  %vm1919 = vweird.f32 %v1913
  %vm1920 = vmor %vm1918, %vm1919
  %v1921 = vsel %vm1920, %v1913, %v1917
  %v1922 = vand.u32 2147483647, %v1037
  %vm1923 = vcmp.eq.f32.partialorder %v1922, 8.507059e+37
  %v1924 = vand.u32 %v1037, 2147483648
  %v1925 = vor.u32 1.1754944e-38, %v1924
  %v1926 = vsel %vm1923, %v1925, %v1921
  %v1927 = vmul.f32 1.0, %v1926
  %v1928 = vrcp.pop %v1038
  %v1929 = vmul.f32 %v1038, %v1928
  %v1930 = vsub.f32 1.0, %v1929
  %v1931 = vmul.f32 %v1928, %v1930
  %v1932 = vadd.f32 %v1928, %v1931
  %vm1933 = vweird.f32 %v1038
  %vm1934 = vweird.f32 %v1928
  %vm1935 = vmor %vm1933, %vm1934
  %v1936 = vsel %vm1935, %v1928, %v1932
  %v1937 = vand.u32 2147483647, %v1038
  %vm1938 = vcmp.eq.f32.partialorder %v1937, 8.507059e+37
  %v1939 = vand.u32 %v1038, 2147483648
  %v1940 = vor.u32 1.1754944e-38, %v1939
  %v1941 = vsel %vm1938, %v1940, %v1936
  %v1942 = vmul.f32 1.0, %v1941
  %v1943 = vrcp.pop %v1039
  %v1944 = vmul.f32 %v1039, %v1943
  %v1945 = vsub.f32 1.0, %v1944
  %v1946 = vmul.f32 %v1943, %v1945
  %v1947 = vadd.f32 %v1943, %v1946
  %vm1948 = vweird.f32 %v1039
  %vm1949 = vweird.f32 %v1943
  %vm1950 = vmor %vm1948, %vm1949
  %v1951 = vsel %vm1950, %v1943, %v1947
  %v1952 = vand.u32 2147483647, %v1039
  %vm1953 = vcmp.eq.f32.partialorder %v1952, 8.507059e+37
  %v1954 = vand.u32 %v1039, 2147483648
  %v1955 = vor.u32 1.1754944e-38, %v1954
  %v1956 = vsel %vm1953, %v1955, %v1951
  %v1957 = vmul.f32 1.0, %v1956
  %v1958 = vrcp.pop %v1040
  %v1959 = vmul.f32 %v1040, %v1958
  %v1960 = vsub.f32 1.0, %v1959
  %v1961 = vmul.f32 %v1958, %v1960
  %v1962 = vadd.f32 %v1958, %v1961
  %vm1963 = vweird.f32 %v1040
  %vm1964 = vweird.f32 %v1958
  %vm1965 = vmor %vm1963, %vm1964
  %v1966 = vsel %vm1965, %v1958, %v1962
  %v1967 = vand.u32 2147483647, %v1040
  %vm1968 = vcmp.eq.f32.partialorder %v1967, 8.507059e+37
  %v1969 = vand.u32 %v1040, 2147483648
  %v1970 = vor.u32 1.1754944e-38, %v1969
  %v1971 = vsel %vm1968, %v1970, %v1966
  %v1972 = vmul.f32 1.0, %v1971
  %v1973 = vrcp.pop %v1041
  %v1974 = vmul.f32 %v1041, %v1973
  %v1975 = vsub.f32 1.0, %v1974
  %v1976 = vmul.f32 %v1973, %v1975
  %v1977 = vadd.f32 %v1973, %v1976
  %vm1978 = vweird.f32 %v1041
  %vm1979 = vweird.f32 %v1973
  %vm1980 = vmor %vm1978, %vm1979
  %v1981 = vsel %vm1980, %v1973, %v1977
  %v1982 = vand.u32 2147483647, %v1041
  %vm1983 = vcmp.eq.f32.partialorder %v1982, 8.507059e+37
  %v1984 = vand.u32 %v1041, 2147483648
  %v1985 = vor.u32 1.1754944e-38, %v1984
  %v1986 = vsel %vm1983, %v1985, %v1981
  %v1987 = vmul.f32 1.0, %v1986
  %v1988 = vrcp.pop %v1042
  %v1989 = vmul.f32 %v1042, %v1988
  %v1990 = vsub.f32 1.0, %v1989
  %v1991 = vmul.f32 %v1988, %v1990
  %v1992 = vadd.f32 %v1988, %v1991
  %vm1993 = vweird.f32 %v1042
  %vm1994 = vweird.f32 %v1988
  %vm1995 = vmor %vm1993, %vm1994
  %v1996 = vsel %vm1995, %v1988, %v1992
  %v1997 = vand.u32 2147483647, %v1042
  %vm1998 = vcmp.eq.f32.partialorder %v1997, 8.507059e+37
  %v1999 = vand.u32 %v1042, 2147483648
  %v2000 = vor.u32 1.1754944e-38, %v1999
  %v2001 = vsel %vm1998, %v2000, %v1996
  %v2002 = vmul.f32 1.0, %v2001
  %vm2003 = vcmask 130048
  %2004 = vst.msk [vmem:[%s5] sm:$0xff] %vm2003, %v1057
  %2005 = vst.msk [vmem:[%s5 + $0x8] sm:$0xff] %vm2003, %v1072
  %2006 = vst.msk [vmem:[%s5 + $0x10] sm:$0xff] %vm2003, %v1087
  %2007 = vst.msk [vmem:[%s5 + $0x18] sm:$0xff] %vm2003, %v1102
  %2008 = vst.msk [vmem:[%s5 + $0x20] sm:$0xff] %vm2003, %v1117
  %2009 = vst.msk [vmem:[%s5 + $0x28] sm:$0xff] %vm2003, %v1132
  %2010 = vst.msk [vmem:[%s5 + $0x30] sm:$0xff] %vm2003, %v1147
  %2011 = vst.msk [vmem:[%s5 + $0x38] sm:$0xff] %vm2003, %v1162
  %2012 = vst.msk [vmem:[%s5 + $0x40] sm:$0xff] %vm2003, %v1177
  %2013 = vst.msk [vmem:[%s5 + $0x48] sm:$0xff] %vm2003, %v1192
  %2014 = vst.msk [vmem:[%s5 + $0x50] sm:$0xff] %vm2003, %v1207
  %2015 = vst.msk [vmem:[%s5 + $0x58] sm:$0xff] %vm2003, %v1222
  %2016 = vst.msk [vmem:[%s5 + $0x60] sm:$0xff] %vm2003, %v1237
  %2017 = vst.msk [vmem:[%s5 + $0x68] sm:$0xff] %vm2003, %v1252
  %2018 = vst.msk [vmem:[%s5 + $0x70] sm:$0xff] %vm2003, %v1267
  %2019 = vst.msk [vmem:[%s5 + $0x78] sm:$0xff] %vm2003, %v1282
  %2020 = vst.msk [vmem:[%s5 + $0x80] sm:$0xff] %vm2003, %v1297
  %2021 = vst.msk [vmem:[%s5 + $0x88] sm:$0xff] %vm2003, %v1312
  %2022 = vst.msk [vmem:[%s5 + $0x90] sm:$0xff] %vm2003, %v1327
  %2023 = vst.msk [vmem:[%s5 + $0x98] sm:$0xff] %vm2003, %v1342
  %2024 = vst.msk [vmem:[%s5 + $0xa0] sm:$0xff] %vm2003, %v1357
  %2025 = vst.msk [vmem:[%s5 + $0xa8] sm:$0xff] %vm2003, %v1372
  %2026 = vst.msk [vmem:[%s5 + $0xb0] sm:$0xff] %vm2003, %v1387
  %2027 = vst.msk [vmem:[%s5 + $0xb8] sm:$0xff] %vm2003, %v1402
  %2028 = vst.msk [vmem:[%s5 + $0xc0] sm:$0xff] %vm2003, %v1417
  %2029 = vst.msk [vmem:[%s5 + $0xc8] sm:$0xff] %vm2003, %v1432
  %2030 = vst.msk [vmem:[%s5 + $0xd0] sm:$0xff] %vm2003, %v1447
  %2031 = vst.msk [vmem:[%s5 + $0xd8] sm:$0xff] %vm2003, %v1462
  %2032 = vst.msk [vmem:[%s5 + $0xe0] sm:$0xff] %vm2003, %v1477
  %2033 = vst.msk [vmem:[%s5 + $0xe8] sm:$0xff] %vm2003, %v1492
  %2034 = vst.msk [vmem:[%s5 + $0xf0] sm:$0xff] %vm2003, %v1507
  %2035 = vst.msk [vmem:[%s5 + $0xf8] sm:$0xff] %vm2003, %v1522
  %2036 = vst.msk [vmem:[%s5 + $0x100] sm:$0xff] %vm2003, %v1537
  %2037 = vst.msk [vmem:[%s5 + $0x108] sm:$0xff] %vm2003, %v1552
  %2038 = vst.msk [vmem:[%s5 + $0x110] sm:$0xff] %vm2003, %v1567
  %2039 = vst.msk [vmem:[%s5 + $0x118] sm:$0xff] %vm2003, %v1582
  %2040 = vst.msk [vmem:[%s5 + $0x120] sm:$0xff] %vm2003, %v1597
  %2041 = vst.msk [vmem:[%s5 + $0x128] sm:$0xff] %vm2003, %v1612
  %2042 = vst.msk [vmem:[%s5 + $0x130] sm:$0xff] %vm2003, %v1627
  %2043 = vst.msk [vmem:[%s5 + $0x138] sm:$0xff] %vm2003, %v1642
  %2044 = vst.msk [vmem:[%s5 + $0x140] sm:$0xff] %vm2003, %v1657
  %2045 = vst.msk [vmem:[%s5 + $0x148] sm:$0xff] %vm2003, %v1672
  %2046 = vst.msk [vmem:[%s5 + $0x150] sm:$0xff] %vm2003, %v1687
  %2047 = vst.msk [vmem:[%s5 + $0x158] sm:$0xff] %vm2003, %v1702
  %2048 = vst.msk [vmem:[%s5 + $0x160] sm:$0xff] %vm2003, %v1717
  %2049 = vst.msk [vmem:[%s5 + $0x168] sm:$0xff] %vm2003, %v1732
  %2050 = vst.msk [vmem:[%s5 + $0x170] sm:$0xff] %vm2003, %v1747
  %2051 = vst.msk [vmem:[%s5 + $0x178] sm:$0xff] %vm2003, %v1762
  %2052 = vst.msk [vmem:[%s5 + $0x180] sm:$0xff] %vm2003, %v1777
  %2053 = vst.msk [vmem:[%s5 + $0x188] sm:$0xff] %vm2003, %v1792
  %2054 = vst.msk [vmem:[%s5 + $0x190] sm:$0xff] %vm2003, %v1807
  %2055 = vst.msk [vmem:[%s5 + $0x198] sm:$0xff] %vm2003, %v1822
  %2056 = vst.msk [vmem:[%s5 + $0x1a0] sm:$0xff] %vm2003, %v1837
  %2057 = vst.msk [vmem:[%s5 + $0x1a8] sm:$0xff] %vm2003, %v1852
  %2058 = vst.msk [vmem:[%s5 + $0x1b0] sm:$0xff] %vm2003, %v1867
  %2059 = vst.msk [vmem:[%s5 + $0x1b8] sm:$0xff] %vm2003, %v1882
  %2060 = vst.msk [vmem:[%s5 + $0x1c0] sm:$0xff] %vm2003, %v1897
  %2061 = vst.msk [vmem:[%s5 + $0x1c8] sm:$0xff] %vm2003, %v1912
  %2062 = vst.msk [vmem:[%s5 + $0x1d0] sm:$0xff] %vm2003, %v1927
  %2063 = vst.msk [vmem:[%s5 + $0x1d8] sm:$0xff] %vm2003, %v1942
  %2064 = vst.msk [vmem:[%s5 + $0x1e0] sm:$0xff] %vm2003, %v1957
  %2065 = vst.msk [vmem:[%s5 + $0x1e8] sm:$0xff] %vm2003, %v1972
  %2066 = vst.msk [vmem:[%s5 + $0x1f0] sm:$0xff] %vm2003, %v1987
  %2067 = vst.msk [vmem:[%s5 + $0x1f8] sm:$0xff] %vm2003, %v2002
  // Predicated region
  $region22: #{tpu_custom_call.1} parent=0 // pred_check
    _
  $region23: #{tpu_custom_call.1} parent=0 // pred_check_branch
    %2069 = sbr.rel (0) target = $region25
  $region24: #{tpu_custom_call.1} parent=0 // pred_region
    _
  $region25: #{tpu_custom_call.1} parent=0 // pred_fallthru
    _
  // Predicated region
  $region26: #{tpu_custom_call.1} parent=0 // pred_check
    _
  $region27: #{tpu_custom_call.1} parent=0 // pred_check_branch
    %2071 = sbr.rel (0) target = $region29
  $region28: #{tpu_custom_call.1} parent=0 // pred_region
    _
  $region29: #{tpu_custom_call.1} parent=0 // pred_fallthru
    _

</llo_original>
